<compile_context>
chip_gen: v7x
topology: tpu7x:2x2x1
jax: 0.10.0
libtpu: 0.0.40
codegen_flags: <defaults>
</compile_context>

<pallas_src>
import functools

import jax
import jax.numpy as jnp
import numpy as np
from jax.experimental import pallas as pl
from jax.experimental.pallas import tpu as pltpu


def _attention_up_kernel(x_ref, wt_ref, b_ref,
                         out_ref, emb_ref, alpha_ref, oa_ref,
                         *, n, thresh, keep_threshold):
    """One grid step: TB bags = rows / n instances."""
    f32 = jnp.float32
    rows, d = x_ref.shape            # rows = TB * N instances in this block
    tb = rows // n                   # bags in this block

    x = x_ref[...]                                                     # (rows, D)

    # Per-instance linear for all TB bags: one MXU matmul.
    oa = jnp.dot(x, wt_ref[...], preferred_element_type=f32) + b_ref[...]   # (rows, C)

    # Attention score: L2 norm over the class dimension (lane reduce).
    s = jnp.sqrt(jnp.sum(oa * oa, axis=1, keepdims=True))              # (rows, 1)

    # Per-bag normalization via a layout-preserving segmented (sublane)
    # reduce: rows are bag-major, so (rows, 1) -> (tb, n, 1) splits the
    # sublane dimension on tile boundaries when n % 8 == 0.  No O(TB^2)
    # mask matmuls, no per-step mask construction.
    # TODO(synk): for N not a multiple of 8 this reshape may force a Mosaic
    # relayout; those shapes would want a mask-matmul fallback.
    s3 = s.reshape(tb, n, 1)
    alpha3 = s3 / jnp.sum(s3, axis=1, keepdims=True)                    # exact divide
    if keep_threshold:
        alpha3 = jnp.maximum(alpha3 - thresh, 0.0)
    # Exact divide again: downstream outputs need sum(alpha) == 1 to f32
    # accuracy.  A bag whose alphas all threshold to zero divides by zero,
    # exactly like the PyTorch reference.
    alpha3 = alpha3 / jnp.sum(alpha3, axis=1, keepdims=True)
    alpha = alpha3.reshape(rows, 1)                                     # (rows, 1)

    # Weighted pooling over instances: VPU multiply + segmented sublane sum.
    emb = jnp.sum((alpha * x).reshape(tb, n, d), axis=1)                # (tb, D)

    # Bag-level logits, computed exactly as the reference (emb @ w.T + b).
    out = jnp.dot(emb, wt_ref[...], preferred_element_type=f32) + b_ref[...]  # (tb, C)

    out_ref[...] = out
    emb_ref[...] = emb
    alpha_ref[...] = alpha          # stored (rows, 1); wrapper reshapes to (B, N)
    oa_ref[...] = oa


def _round_up(v, m):
    return ((v + m - 1) // m) * m


def _pick_tb(batch, n, d, c, budget_bytes=18 * 1024 * 1024):
    """Largest BlockSpec-legal bags-per-step whose double-buffered working set
    fits `budget_bytes`, preferring >= 2 grid steps so ("parallel",) grid
    semantics can shard across TensorCores.  Legal: TB divides B and
    (TB % 8 == 0 or TB == B) so every block's second-minor dim satisfies the
    (8, 128) tiling rule."""
    legal = [t for t in range(1, batch + 1)
             if batch % t == 0 and (t % 8 == 0 or t == batch)]

    dpad, cpad = _round_up(d, 128), _round_up(c, 128)

    def working_set(t):
        rows = t * n
        x_blk = rows * d * 4
        oa_blk = rows * cpad * 4          # lane-padded VMEM footprint
        emb_blk = t * dpad * 4
        out_blk = t * cpad * 4
        al_blk = rows * 128 * 4           # (rows, 1) pads to a full lane tile
        dbl = 2 * (x_blk + oa_blk + emb_blk + out_blk + al_blk)   # double buffers
        resident = 2 * (d * cpad * 4 + 8 * 128 * 4)               # w^T, bias
        temps = 2 * (x_blk + oa_blk)      # in-kernel f32 temporaries (approx.)
        return dbl + resident + temps

    fitting = [t for t in legal if working_set(t) <= budget_bytes] or [min(legal)]
    multi_step = [t for t in fitting if batch // t >= 2]
    return max(multi_step) if multi_step else max(fitting)


def attention_up_forward(x, w, b, patch_alpha=None, *,
                         keep_patch_threshold=True, top_patch_num=None):
    """x: (B, N, D), w: (C, D), b: (C,).  Returns (out, embedding, alpha, out_alpha)."""
    x = jnp.asarray(x, jnp.float32)
    w = jnp.asarray(w, jnp.float32)
    b = jnp.asarray(b, jnp.float32)

    if not keep_patch_threshold:
        if patch_alpha is None or top_patch_num is None:
            raise ValueError("patch_alpha and top_patch_num are required when "
                             "keep_patch_threshold=False")
        # Data-dependent per-bag top-k row gather: not a rectangular-tile
        # access pattern, so it is done in plain JAX before the kernel.
        idx = jnp.asarray(patch_alpha, jnp.int32)[:, :top_patch_num]
        x = jnp.take_along_axis(x, idx[:, :, None], axis=1)

    B, N, D = x.shape
    C = w.shape[0]
    TB = _pick_tb(B, N, D, C)
    nb = B // TB
    rows_blk = TB * N

    # Glue: flatten bags (row r <-> bag r // N), transpose weights, 2-D bias.
    x2 = x.reshape(B * N, D)
    wt = w.T                       # (D, C)
    br = b.reshape(1, C)

    kernel = functools.partial(_attention_up_kernel,
                               n=N, thresh=0.1 / float(N),
                               keep_threshold=keep_patch_threshold)

    flops = nb * (2 * rows_blk * D * C        # instance linear
                  + 2 * TB * D * C            # bag logits
                  + 6 * rows_blk * D          # weighted pooling + segmented sum
                  + 10 * rows_blk * max(C, 1))  # scores / normalization (approx.)
    transcendentals = nb * 3 * rows_blk       # sqrt + divides
    bytes_accessed = 4 * (B * N * D + D * C + C            # reads
                          + B * C + B * D + B * N + B * N * C)  # writes

    out, emb, alpha2, oa2 = pl.pallas_call(
        kernel,
        out_shape=(
            jax.ShapeDtypeStruct((B, C), jnp.float32),        # out
            jax.ShapeDtypeStruct((B, D), jnp.float32),        # embedding
            jax.ShapeDtypeStruct((B * N, 1), jnp.float32),    # alpha (flat rows)
            jax.ShapeDtypeStruct((B * N, C), jnp.float32),    # out_alpha (flat rows)
        ),
        grid=(nb,),
        in_specs=[
            pl.BlockSpec((rows_blk, D), lambda g: (g, 0)),    # x rows
            pl.BlockSpec((D, C), lambda g: (0, 0)),           # w^T (resident)
            pl.BlockSpec((1, C), lambda g: (0, 0)),           # b   (resident)
        ],
        out_specs=(
            pl.BlockSpec((TB, C), lambda g: (g, 0)),
            pl.BlockSpec((TB, D), lambda g: (g, 0)),
            pl.BlockSpec((rows_blk, 1), lambda g: (g, 0)),
            pl.BlockSpec((rows_blk, C), lambda g: (g, 0)),
        ),
        compiler_params=pltpu.CompilerParams(
            dimension_semantics=("parallel",),                # megacore sharding
            vmem_limit_bytes=32 * 1024 * 1024),
        cost_estimate=pl.CostEstimate(flops=int(flops),
                                      transcendentals=int(transcendentals),
                                      bytes_accessed=int(bytes_accessed)),
    )(x2, wt, br)

    return out, emb, alpha2.reshape(B, N), oa2.reshape(B, N, C)


def _reference(x, w, b, keep_threshold=True):
    x = np.asarray(x, np.float64)
    w = np.asarray(w, np.float64)
    b = np.asarray(b, np.float64)
    oa = x @ w.T + b
    s = np.sqrt((oa ** 2).sum(axis=2))
    alpha = s / s.sum(axis=1, keepdims=True)
    if keep_threshold:
        alpha = np.maximum(alpha - 0.1 / float(x.shape[1]), 0.0)
    alpha = alpha / alpha.sum(axis=1, keepdims=True)
    emb = (alpha[..., None] * x).sum(axis=1)
    out = emb @ w.T + b
    return out, emb, alpha, oa


if __name__ == "__main__":
    # Small shapes consistent with the module: B bags of N patches, D features,
    # C classes (real model: D=512, C=2 -- D shrunk, B raised to exercise tiling).
    B, N, D, C = 64, 8, 128, 2

    key = jax.random.PRNGKey(0)
    kx, kw, kb = jax.random.split(key, 3)
    x = jax.random.normal(kx, (B, N, D), dtype=jnp.float32)
    lim = 1.0 / float(np.sqrt(D))          # PyTorch-Linear-style init range
    w = jax.random.uniform(kw, (C, D), jnp.float32, -lim, lim)
    b = jax.random.uniform(kb, (C,), jnp.float32, -lim, lim)

    out, emb, alpha, oa = attention_up_forward(x, w, b, keep_patch_threshold=True)
    jax.block_until_ready((out, emb, alpha, oa))

    r_out, r_emb, r_alpha, r_oa = _reference(x, w, b, keep_threshold=True)
    assert out.shape == (B, C) and emb.shape == (B, D)
    assert alpha.shape == (B, N) and oa.shape == (B, N, C)
    np.testing.assert_allclose(np.asarray(out), r_out, rtol=2e-3, atol=1e-4)
    np.testing.assert_allclose(np.asarray(emb), r_emb, rtol=2e-3, atol=1e-4)
    np.testing.assert_allclose(np.asarray(alpha), r_alpha, rtol=2e-3, atol=1e-4)
    np.testing.assert_allclose(np.asarray(oa), r_oa, rtol=2e-3, atol=1e-4)

    # keep_patch_threshold=False path: top-k gather (identity indices here)
    # handled in the wrapper, threshold skipped inside the kernel.
    patch_alpha = jnp.tile(jnp.arange(N, dtype=jnp.int32)[None, :], (B, 1))
    res2 = attention_up_forward(x, w, b, patch_alpha=patch_alpha,
                                keep_patch_threshold=False, top_patch_num=N)
    jax.block_until_ready(res2)
    for got, want in zip(res2, _reference(x, w, b, keep_threshold=False)):
        np.testing.assert_allclose(np.asarray(got), want, rtol=2e-3, atol=1e-4)

    print("KERNEL_OK")
</pallas_src>

<mosaic_0001>
module attributes {stable_mosaic.version = 11 : i64} {
  func.func @_attention_up_kernel(%arg0: i32, %arg1: memref<256x128xf32, #tpu.memory_space<vmem>>, %arg2: memref<128x2xf32, #tpu.memory_space<vmem>>, %arg3: memref<1x2xf32, #tpu.memory_space<vmem>>, %arg4: memref<32x2xf32, #tpu.memory_space<vmem>>, %arg5: memref<32x128xf32, #tpu.memory_space<vmem>>, %arg6: memref<256x1xf32, #tpu.memory_space<vmem>>, %arg7: memref<256x2xf32, #tpu.memory_space<vmem>>) attributes {dimension_semantics = [#tpu.dimension_semantics<parallel>], iteration_bounds = array<i64: 2>, scalar_prefetch = 0 : i64, scratch_operands = 0 : i64, tpu.core_type = #tpu.core_type<tc>, window_params = [{transform_indices = @transform_0, window_bounds = array<i64: 256, 128>}, {pipeline_mode = #tpu.pipeline_mode<synchronous>, transform_indices = @transform_1, window_bounds = array<i64: 128, 2>}, {pipeline_mode = #tpu.pipeline_mode<synchronous>, transform_indices = @transform_2, window_bounds = array<i64: 1, 2>}, {transform_indices = @transform_3, window_bounds = array<i64: 32, 2>}, {transform_indices = @transform_4, window_bounds = array<i64: 32, 128>}, {transform_indices = @transform_5, window_bounds = array<i64: 256, 1>}, {transform_indices = @transform_6, window_bounds = array<i64: 256, 2>}]} {
    %c0 = arith.constant 0 : index
    %c0_0 = arith.constant 0 : index
    %0 = vector.load %arg1[%c0, %c0_0] : memref<256x128xf32, #tpu.memory_space<vmem>>, vector<256x128xf32>
    %c0_1 = arith.constant 0 : index
    %c0_2 = arith.constant 0 : index
    %1 = vector.load %arg2[%c0_1, %c0_2] : memref<128x2xf32, #tpu.memory_space<vmem>>, vector<128x2xf32>
    %cst = arith.constant dense<0.000000e+00> : vector<256x2xf32>
    %2 = tpu.matmul %0, %1, %cst {dimension_numbers = #tpu.dot_dimension_numbers<[1], [0], [0], [1], [0, 0, 1, 1], [], []>} : vector<256x128xf32>, vector<128x2xf32>, vector<256x2xf32> -> vector<256x2xf32>
    %c0_3 = arith.constant 0 : index
    %c0_4 = arith.constant 0 : index
    %3 = vector.load %arg3[%c0_3, %c0_4] : memref<1x2xf32, #tpu.memory_space<vmem>>, vector<1x2xf32>
    %4 = vector.broadcast %3 : vector<1x2xf32> to vector<256x2xf32>
    %5 = arith.addf %2, %4 : vector<256x2xf32>
    %6 = arith.mulf %5, %5 : vector<256x2xf32>
    %cst_5 = arith.constant dense<0.000000e+00> : vector<256xf32>
    %7 = vector.multi_reduction <add>, %6, %cst_5 [1] : vector<256x2xf32> to vector<256xf32>
    %8 = vector.shape_cast %7 : vector<256xf32> to vector<256x1xf32>
    %9 = math.sqrt %8 : vector<256x1xf32>
    %10 = vector.shape_cast %9 : vector<256x1xf32> to vector<32x8x1xf32>
    %cst_6 = arith.constant dense<0.000000e+00> : vector<32x1xf32>
    %11 = vector.multi_reduction <add>, %10, %cst_6 [1] : vector<32x8x1xf32> to vector<32x1xf32>
    %12 = vector.shape_cast %11 : vector<32x1xf32> to vector<32x1x1xf32>
    %13 = vector.broadcast %12 : vector<32x1x1xf32> to vector<32x8x1xf32>
    %14 = arith.divf %10, %13 : vector<32x8x1xf32>
    %cst_7 = arith.constant 1.250000e-02 : f32
    %15 = vector.broadcast %cst_7 : f32 to vector<32x8x1xf32>
    %16 = arith.subf %14, %15 : vector<32x8x1xf32>
    %cst_8 = arith.constant 0.000000e+00 : f32
    %17 = vector.broadcast %cst_8 : f32 to vector<32x8x1xf32>
    %18 = arith.maximumf %16, %17 : vector<32x8x1xf32>
    %cst_9 = arith.constant dense<0.000000e+00> : vector<32x1xf32>
    %19 = vector.multi_reduction <add>, %18, %cst_9 [1] : vector<32x8x1xf32> to vector<32x1xf32>
    %20 = vector.shape_cast %19 : vector<32x1xf32> to vector<32x1x1xf32>
    %21 = vector.broadcast %20 : vector<32x1x1xf32> to vector<32x8x1xf32>
    %22 = arith.divf %18, %21 : vector<32x8x1xf32>
    %23 = vector.shape_cast %22 : vector<32x8x1xf32> to vector<256x1xf32>
    %24 = vector.broadcast %23 : vector<256x1xf32> to vector<256x128xf32>
    %25 = arith.mulf %24, %0 : vector<256x128xf32>
    %26 = vector.shape_cast %25 : vector<256x128xf32> to vector<32x8x128xf32>
    %cst_10 = arith.constant dense<0.000000e+00> : vector<32x128xf32>
    %27 = vector.multi_reduction <add>, %26, %cst_10 [1] : vector<32x8x128xf32> to vector<32x128xf32>
    %c0_11 = arith.constant 0 : index
    %c0_12 = arith.constant 0 : index
    %28 = vector.load %arg2[%c0_11, %c0_12] : memref<128x2xf32, #tpu.memory_space<vmem>>, vector<128x2xf32>
    %cst_13 = arith.constant dense<0.000000e+00> : vector<32x2xf32>
    %29 = tpu.matmul %27, %28, %cst_13 {dimension_numbers = #tpu.dot_dimension_numbers<[1], [0], [0], [1], [0, 0, 1, 1], [], []>} : vector<32x128xf32>, vector<128x2xf32>, vector<32x2xf32> -> vector<32x2xf32>
    %c0_14 = arith.constant 0 : index
    %c0_15 = arith.constant 0 : index
    %30 = vector.load %arg3[%c0_14, %c0_15] : memref<1x2xf32, #tpu.memory_space<vmem>>, vector<1x2xf32>
    %31 = vector.broadcast %30 : vector<1x2xf32> to vector<32x2xf32>
    %32 = arith.addf %29, %31 : vector<32x2xf32>
    %c0_16 = arith.constant 0 : index
    %c0_17 = arith.constant 0 : index
    %33 = vector.load %arg4[%c0_16, %c0_17] : memref<32x2xf32, #tpu.memory_space<vmem>>, vector<32x2xf32>
    tpu.vector_store %arg4[%c0_16, %c0_17], %32 {strides = array<i32>} : memref<32x2xf32, #tpu.memory_space<vmem>>, vector<32x2xf32>,
    %c0_18 = arith.constant 0 : index
    %c0_19 = arith.constant 0 : index
    %34 = vector.load %arg5[%c0_18, %c0_19] : memref<32x128xf32, #tpu.memory_space<vmem>>, vector<32x128xf32>
    tpu.vector_store %arg5[%c0_18, %c0_19], %27 {strides = array<i32>} : memref<32x128xf32, #tpu.memory_space<vmem>>, vector<32x128xf32>,
    %c0_20 = arith.constant 0 : index
    %c0_21 = arith.constant 0 : index
    %35 = vector.load %arg6[%c0_20, %c0_21] : memref<256x1xf32, #tpu.memory_space<vmem>>, vector<256x1xf32>
    tpu.vector_store %arg6[%c0_20, %c0_21], %23 {strides = array<i32>} : memref<256x1xf32, #tpu.memory_space<vmem>>, vector<256x1xf32>,
    %c0_22 = arith.constant 0 : index
    %c0_23 = arith.constant 0 : index
    %36 = vector.load %arg7[%c0_22, %c0_23] : memref<256x2xf32, #tpu.memory_space<vmem>>, vector<256x2xf32>
    tpu.vector_store %arg7[%c0_22, %c0_23], %5 {strides = array<i32>} : memref<256x2xf32, #tpu.memory_space<vmem>>, vector<256x2xf32>,
    return
  }
  func.func @transform_0(%arg0: i32) -> (i32, i32) {
    %c0_i32 = arith.constant 0 : i32
    %c0_i32_0 = arith.constant 0 : i32
    return %arg0, %c0_i32 : i32, i32
  }
  func.func @transform_1(%arg0: i32) -> (i32, i32) {
    %c0_i32 = arith.constant 0 : i32
    %c0_i32_0 = arith.constant 0 : i32
    %c0_i32_1 = arith.constant 0 : i32
    return %c0_i32, %c0_i32_0 : i32, i32
  }
  func.func @transform_2(%arg0: i32) -> (i32, i32) {
    %c0_i32 = arith.constant 0 : i32
    %c0_i32_0 = arith.constant 0 : i32
    %c0_i32_1 = arith.constant 0 : i32
    return %c0_i32, %c0_i32_0 : i32, i32
  }
  func.func @transform_3(%arg0: i32) -> (i32, i32) {
    %c0_i32 = arith.constant 0 : i32
    %c0_i32_0 = arith.constant 0 : i32
    return %arg0, %c0_i32 : i32, i32
  }
  func.func @transform_4(%arg0: i32) -> (i32, i32) {
    %c0_i32 = arith.constant 0 : i32
    %c0_i32_0 = arith.constant 0 : i32
    return %arg0, %c0_i32 : i32, i32
  }
  func.func @transform_5(%arg0: i32) -> (i32, i32) {
    %c0_i32 = arith.constant 0 : i32
    %c0_i32_0 = arith.constant 0 : i32
    return %arg0, %c0_i32 : i32, i32
  }
  func.func @transform_6(%arg0: i32) -> (i32, i32) {
    %c0_i32 = arith.constant 0 : i32
    %c0_i32_0 = arith.constant 0 : i32
    return %arg0, %c0_i32 : i32, i32
  }
}

</mosaic_0001>

<llo_original>
// kernel: tpu_custom_call.1
$region0: #{tpu_custom_call.1}
  #allocation0 [shape = 'u32[]', space=smem, size = 0x4, offset = 0x4, fixed_abs, tag = 'smem constant byte address 0x4 - core index']
  #allocation1 [shape = 'u32[144,128]{1,0:T(1,128)}', space=vmem, size = 0x12000, scoped, tag = 'internal scratch']
  %s0 = inlined_call_operand.hbm [shape: f32[512,128], index: 0, kind: input, shape index: {}]
  %s1 = inlined_call_operand.vmem [shape: f32[128,2], index: 1, kind: input, shape index: {}]
  %s2 = inlined_call_operand.vmem [shape: f32[1,2], index: 2, kind: input, shape index: {}]
  %s3 = inlined_call_operand.vmem [shape: f32[64,2], index: 3, kind: output, shape index: {0}]
  %s4 = inlined_call_operand.hbm [shape: f32[64,128], index: 4, kind: output, shape index: {1}]
  %s5 = inlined_call_operand.vmem [shape: f32[512,1], index: 5, kind: output, shape index: {2}]
  %s6 = inlined_call_operand.vmem [shape: f32[512,2], index: 6, kind: output, shape index: {3}]
  %7 = xla_tuple %s3, %s4, %s5, %s6
  %s8 = sld [smem:[#allocation0]]
  $region73: #{tpu_custom_call.1} parent=0
    _
  %s10 = ssub.s32 1, %s8
  %s11 = scalar_select 0, %s10, %s8
  $region1: #{tpu_custom_call.1} parent=0
    #allocation2 [shape = 'u8[262144]{0}', space=vmem, size = 0x40000, scoped, tag = 'input window, operand 0']
    #allocation3 [shape = 's32[2]{0}', space=sflag, size = 0x8, scoped, tag = 'scoped memory for tpu_custom_call.1']
    #allocation4 [shape = 's32[2]{0}', space=sflag, size = 0x8, scoped, tag = 'scoped memory for tpu_custom_call.1']
    #allocation5 [shape = 'u8[32768]{0}', space=vmem, size = 0x8000, scoped, tag = 'output window, operand 1']
    %12 = vsyncpa [#allocation3], 0
    %s13 = scalar_lea.sflag [#allocation3], 1
    %14 = vsyncpa %s13, 0
    %15 = vsyncpa [#allocation4], 0
    %s16 = scalar_lea.sflag [#allocation4], 1
    %17 = vsyncpa %s16, 0
    loop: start=0, step=1, limit=4
    $region2: #{tpu_custom_call.1} parent=1 // loop_pre_header
      _
    $region3: #{tpu_custom_call.1} parent=1 // loop_header
      %s19 = sphi 0, %s23
      %p20 = scmp.ge.s32.totalorder %s19, 4
      %s29 = sphi 0, %s31
      %s32 = sphi 0, %s29
      %s33 = sphi 0, %s32
      %s49 = sphi 0, %s33
      %s53 = sphi 0, %s53
      %s55 = sphi 0, %s53
      %s56 = sphi 0, %s55
      %s70 = sphi 0, %s56
      %s74 = sphi 0, %s74
      %s76 = sphi 0, %s74
      %s77 = sphi 0, %s76
      %s91 = sphi 0, %s77
      %s97 = sphi 0, %s99
      %s100 = sphi 0, %s97
      %s101 = sphi 0, %s100
      %s117 = sphi 0, %s101
      %s123 = sphi 0, %s125
      %s126 = sphi 0, %s123
      %s127 = sphi 0, %s126
      %s143 = sphi 0, %s127
      %s149 = sphi 0, %s151
      %s152 = sphi 0, %s149
      %s153 = sphi 0, %s152
      %s169 = sphi 0, %s153
      %s175 = sphi 0, %s177
      %s178 = sphi 0, %s175
      %s179 = sphi 0, %s178
      %s195 = sphi 0, %s179
    $region4: #{tpu_custom_call.1} parent=1 // loop_header_branch
      %22 = sbr.rel (%p20) target = $region8
    $region5: #{tpu_custom_call.1} parent=1 // loop_body
      %s24 = ssub.s32 %s19, 1
      %s25 = ssub.s32 %s19, 2
      %s26 = sadd.s32 %s19, 1
      %s27 = ssub.s32 %s19, %s26
      %p28 = scmp.eq.s32.totalorder %s27, 0
      %s30 = sadd.s32 %s29, 1
      %s31 = scalar_select %p28, %s29, %s30
      %p34 = pneg %p28
      %p35 = scmp.eq.s32.totalorder %s19, 1
      %p36 = por %p34, %p35
      %p37 = scmp.ne.s32.totalorder %s29, %s32
      %p38 = scmp.eq.s32.totalorder %s19, 0
      %p39 = por %p37, %p38
      %p40 = scmp.ne.s32.totalorder %s29, %s32
      %p41 = scmp.eq.s32.totalorder %s24, 1
      %p42 = por %p40, %p41
      %p43 = scmp.ne.s32.totalorder %s32, %s33
      %p44 = scmp.eq.s32.totalorder %s24, 0
      %p45 = por %p43, %p44
      %p46 = scmp.ne.s32.totalorder %s32, %s33
      %p47 = scmp.eq.s32.totalorder %s25, 1
      %p48 = por %p46, %p47
      %p50 = scmp.ne.s32.totalorder %s33, %s49
      %p51 = scmp.eq.s32.totalorder %s25, 0
      %p52 = por %p50, %p51
      %s54 = sadd.s32 %s53, 1
      %p57 = scmp.eq.s32.totalorder %s19, 1
      %p58 = scmp.ne.s32.totalorder %s53, %s55
      %p59 = scmp.eq.s32.totalorder %s19, 0
      %p60 = por %p58, %p59
      %p61 = scmp.ne.s32.totalorder %s53, %s55
      %p62 = scmp.eq.s32.totalorder %s24, 1
      %p63 = por %p61, %p62
      %p64 = scmp.ne.s32.totalorder %s55, %s56
      %p65 = scmp.eq.s32.totalorder %s24, 0
      %p66 = por %p64, %p65
      %p67 = scmp.ne.s32.totalorder %s55, %s56
      %p68 = scmp.eq.s32.totalorder %s25, 1
      %p69 = por %p67, %p68
      %p71 = scmp.ne.s32.totalorder %s56, %s70
      %p72 = scmp.eq.s32.totalorder %s25, 0
      %p73 = por %p71, %p72
      %s75 = sadd.s32 %s74, 1
      %p78 = scmp.eq.s32.totalorder %s19, 1
      %p79 = scmp.ne.s32.totalorder %s74, %s76
      %p80 = scmp.eq.s32.totalorder %s19, 0
      %p81 = por %p79, %p80
      %p82 = scmp.ne.s32.totalorder %s74, %s76
      %p83 = scmp.eq.s32.totalorder %s24, 1
      %p84 = por %p82, %p83
      %p85 = scmp.ne.s32.totalorder %s76, %s77
      %p86 = scmp.eq.s32.totalorder %s24, 0
      %p87 = por %p85, %p86
      %p88 = scmp.ne.s32.totalorder %s76, %s77
      %p89 = scmp.eq.s32.totalorder %s25, 1
      %p90 = por %p88, %p89
      %p92 = scmp.ne.s32.totalorder %s77, %s91
      %p93 = scmp.eq.s32.totalorder %s25, 0
      %p94 = por %p92, %p93
      %s95 = ssub.s32 %s19, %s26
      %p96 = scmp.eq.s32.totalorder %s95, 0
      %s98 = sadd.s32 %s97, 1
      %s99 = scalar_select %p96, %s97, %s98
      %p102 = pneg %p96
      %p103 = scmp.eq.s32.totalorder %s19, 1
      %p104 = por %p102, %p103
      %p105 = scmp.ne.s32.totalorder %s97, %s100
      %p106 = scmp.eq.s32.totalorder %s19, 0
      %p107 = por %p105, %p106
      %p108 = scmp.ne.s32.totalorder %s97, %s100
      %p109 = scmp.eq.s32.totalorder %s24, 1
      %p110 = por %p108, %p109
      %p111 = scmp.ne.s32.totalorder %s100, %s101
      %p112 = scmp.eq.s32.totalorder %s24, 0
      %p113 = por %p111, %p112
      %p114 = scmp.ne.s32.totalorder %s100, %s101
      %p115 = scmp.eq.s32.totalorder %s25, 1
      %p116 = por %p114, %p115
      %p118 = scmp.ne.s32.totalorder %s101, %s117
      %p119 = scmp.eq.s32.totalorder %s25, 0
      %p120 = por %p118, %p119
      %s121 = ssub.s32 %s19, %s26
      %p122 = scmp.eq.s32.totalorder %s121, 0
      %s124 = sadd.s32 %s123, 1
      %s125 = scalar_select %p122, %s123, %s124
      %p128 = pneg %p122
      %p129 = scmp.eq.s32.totalorder %s19, 1
      %p130 = por %p128, %p129
      %p131 = scmp.ne.s32.totalorder %s123, %s126
      %p132 = scmp.eq.s32.totalorder %s19, 0
      %p133 = por %p131, %p132
      %p134 = scmp.ne.s32.totalorder %s123, %s126
      %p135 = scmp.eq.s32.totalorder %s24, 1
      %p136 = por %p134, %p135
      %p137 = scmp.ne.s32.totalorder %s126, %s127
      %p138 = scmp.eq.s32.totalorder %s24, 0
      %p139 = por %p137, %p138
      %p140 = scmp.ne.s32.totalorder %s126, %s127
      %p141 = scmp.eq.s32.totalorder %s25, 1
      %p142 = por %p140, %p141
      %p144 = scmp.ne.s32.totalorder %s127, %s143
      %p145 = scmp.eq.s32.totalorder %s25, 0
      %p146 = por %p144, %p145
      %s147 = ssub.s32 %s19, %s26
      %p148 = scmp.eq.s32.totalorder %s147, 0
      %s150 = sadd.s32 %s149, 1
      %s151 = scalar_select %p148, %s149, %s150
      %p154 = pneg %p148
      %p155 = scmp.eq.s32.totalorder %s19, 1
      %p156 = por %p154, %p155
      %p157 = scmp.ne.s32.totalorder %s149, %s152
      %p158 = scmp.eq.s32.totalorder %s19, 0
      %p159 = por %p157, %p158
      %p160 = scmp.ne.s32.totalorder %s149, %s152
      %p161 = scmp.eq.s32.totalorder %s24, 1
      %p162 = por %p160, %p161
      %p163 = scmp.ne.s32.totalorder %s152, %s153
      %p164 = scmp.eq.s32.totalorder %s24, 0
      %p165 = por %p163, %p164
      %p166 = scmp.ne.s32.totalorder %s152, %s153
      %p167 = scmp.eq.s32.totalorder %s25, 1
      %p168 = por %p166, %p167
      %p170 = scmp.ne.s32.totalorder %s153, %s169
      %p171 = scmp.eq.s32.totalorder %s25, 0
      %p172 = por %p170, %p171
      %s173 = ssub.s32 %s19, %s26
      %p174 = scmp.eq.s32.totalorder %s173, 0
      %s176 = sadd.s32 %s175, 1
      %s177 = scalar_select %p174, %s175, %s176
      %p180 = pneg %p174
      %p181 = scmp.eq.s32.totalorder %s19, 1
      %p182 = por %p180, %p181
      %p183 = scmp.ne.s32.totalorder %s175, %s178
      %p184 = scmp.eq.s32.totalorder %s19, 0
      %p185 = por %p183, %p184
      %p186 = scmp.ne.s32.totalorder %s175, %s178
      %p187 = scmp.eq.s32.totalorder %s24, 1
      %p188 = por %p186, %p187
      %p189 = scmp.ne.s32.totalorder %s178, %s179
      %p190 = scmp.eq.s32.totalorder %s24, 0
      %p191 = por %p189, %p190
      %p192 = scmp.ne.s32.totalorder %s178, %s179
      %p193 = scmp.eq.s32.totalorder %s25, 1
      %p194 = por %p192, %p193
      %p196 = scmp.ne.s32.totalorder %s179, %s195
      %p197 = scmp.eq.s32.totalorder %s25, 0
      %p198 = por %p196, %p197
      %p199 = scmp.le.s32.totalorder 1, %s19
      %p200 = scmp.lt.s32.totalorder %s19, 3
      %p201 = pnand %p199, %p200
      %p202 = pneg %p201
      // Predicated region
      $region9: #{tpu_custom_call.1} parent=5 // pred_check
        _
      $region10: #{tpu_custom_call.1} parent=5 // pred_check_branch
        %204 = sbr.rel (%p201) target = $region12
      $region11: #{tpu_custom_call.1} parent=5 // pred_region
        %s205 = ssub.s32 %s19, 1
        // Predicated region
        $region13: #{tpu_custom_call.1} parent=11 // pred_check
          %p206 = pneg %p66
        $region14: #{tpu_custom_call.1} parent=11 // pred_check_branch
          %208 = sbr.rel (%p206) target = $region16
        $region15: #{tpu_custom_call.1} parent=11 // pred_region
          _
        $region16: #{tpu_custom_call.1} parent=11 // pred_fallthru
          _
        // Predicated region
        $region17: #{tpu_custom_call.1} parent=11 // pred_check
          %p209 = pneg %p87
        $region18: #{tpu_custom_call.1} parent=11 // pred_check_branch
          %211 = sbr.rel (%p209) target = $region20
        $region19: #{tpu_custom_call.1} parent=11 // pred_region
          _
        $region20: #{tpu_custom_call.1} parent=11 // pred_fallthru
          _
      $region12: #{tpu_custom_call.1} parent=5 // pred_fallthru
        _
      %p212 = scmp.lt.s32.totalorder %s19, 2
      // Predicated region
      $region21: #{tpu_custom_call.1} parent=5 // pred_check
        %p213 = pneg %p212
      $region22: #{tpu_custom_call.1} parent=5 // pred_check_branch
        %215 = sbr.rel (%p213) target = $region24
      $region23: #{tpu_custom_call.1} parent=5 // pred_region
        // Predicated region
        $region25: #{tpu_custom_call.1} parent=23 // pred_check
          %p216 = pneg %p39
        $region26: #{tpu_custom_call.1} parent=23 // pred_check_branch
          %218 = sbr.rel (%p216) target = $region28
        $region27: #{tpu_custom_call.1} parent=23 // pred_region
          %s219 = sand.u32 %s29, 1
          %s220 = scalar_lea.sflag [#allocation3], %s219
          %s221 = sand.u32 %s29, 1
          %s222 = smul.addr %s221, 256
          %s223 = scalar_lea.vmem [#allocation2], %s222
          %s224 = smul.u32 32, %s19
          %s226 = ssub.s32 4096, 4096
          %227 = vsyncadd %s220, %s226
          %s228 = smul.addr %s224, 128
          %s229 = scalar_lea.hbm %s0, %s228
          %s230 = sshll.u32 %s223, 4
          %s231 = int_to_ptr.vmem [resolvable:$true] %s230
          %236 = dma.hbm_to_vmem [thread:$0]  %s229, 4096, %s231, %s220, 128, 128, 8
        $region28: #{tpu_custom_call.1} parent=23 // pred_fallthru
          _
      $region24: #{tpu_custom_call.1} parent=5 // pred_fallthru
        _
      %p237 = scmp.le.s32.totalorder 1, %s19
      %p238 = scmp.lt.s32.totalorder %s19, 3
      %p239 = pnand %p237, %p238
      %p240 = pneg %p239
      // Predicated region
      $region29: #{tpu_custom_call.1} parent=5 // pred_check
        _
      $region30: #{tpu_custom_call.1} parent=5 // pred_check_branch
        %242 = sbr.rel (%p239) target = $region32
      $region31: #{tpu_custom_call.1} parent=5 // pred_region
        %s243 = ssub.s32 %s19, 1
        %s244 = sand.u32 %s32, 1
        %s245 = scalar_lea.sflag [#allocation3], %s244
        %s246 = sand.u32 %s32, 1
        %s247 = smul.addr %s246, 256
        %s248 = scalar_lea.vmem [#allocation2], %s247
        // Predicated region
        $region33: #{tpu_custom_call.1} parent=31 // pred_check
          %p249 = pneg %p45
        $region34: #{tpu_custom_call.1} parent=31 // pred_check_branch
          %251 = sbr.rel (%p249) target = $region36
        $region35: #{tpu_custom_call.1} parent=31 // pred_region
          %252 = dma.done %s245, 4096
        $region36: #{tpu_custom_call.1} parent=31 // pred_fallthru
          _
        %s253 = sand.u32 %s32, 1
        %s254 = scalar_lea.sflag [#allocation3], %s253
        %s255 = sand.u32 %s32, 1
        %s256 = smul.addr %s255, 256
        %s257 = scalar_lea.vmem [#allocation2], %s256
        %p258 = pneg %p45
        %p259 = pneg %p42
        %p260 = pneg %p66
        %p261 = pneg %p63
        %p262 = pneg %p87
        %p263 = pneg %p84
        %p264 = pneg %p113
        %p265 = pneg %p110
        %s266 = smul.u32 4, %s24
        %p267 = scmp.lt.s32.totalorder %s266, 7
        %s268 = scalar_select %p267, %s266, 7
        %s269 = smul.addr %s268, 8
        %s270 = scalar_lea.vmem %s3, %s269
        %p271 = pneg %p139
        %p272 = pneg %p136
        %s273 = sand.u32 %s126, 1
        %s274 = scalar_lea.sflag [#allocation4], %s273
        %s275 = sand.u32 %s126, 1
        %s276 = smul.addr %s275, 32
        %s277 = scalar_lea.vmem [#allocation5], %s276
        %p278 = pneg %p165
        %p279 = pneg %p162
        %s280 = smul.u32 32, %s24
        %p281 = scmp.lt.s32.totalorder %s280, 63
        %s282 = scalar_select %p281, %s280, 63
        %s283 = smul.addr %s282, 8
        %s284 = scalar_lea.vmem %s5, %s283
        %p285 = pneg %p191
        %p286 = pneg %p188
        %s287 = smul.u32 32, %s24
        %p288 = scmp.lt.s32.totalorder %s287, 63
        %s289 = scalar_select %p288, %s287, 63
        %s290 = smul.addr %s289, 8
        %s291 = scalar_lea.vmem %s6, %s290
        %s292 = smul.u32 32, %s24
        %s293 = smul.u32 4, %s24
        %p294 = scmp.lt.s32.totalorder %s293, 7
        %s295 = scalar_select %p294, %s293, 7
        %s296 = smul.addr %s295, 8
        %s297 = scalar_lea.vmem %s3, %s296
        %s298 = smul.u32 4, %s24
        %s299 = smul.u32 4, %s24
        %s300 = smul.u32 32, %s24
        %p301 = scmp.lt.s32.totalorder %s300, 63
        %s302 = scalar_select %p301, %s300, 63
        %s303 = smul.addr %s302, 8
        %s304 = scalar_lea.vmem %s5, %s303
        %s305 = smul.u32 32, %s24
        %s306 = smul.u32 32, %s24
        %p307 = scmp.lt.s32.totalorder %s306, 63
        %s308 = scalar_select %p307, %s306, 63
        %s309 = smul.addr %s308, 8
        %s310 = scalar_lea.vmem %s6, %s309
        %s311 = smul.u32 32, %s24
        %v312 = vld [vmem:[%s248] sm:$0xff]
        %v313 = vld [vmem:[%s248 + $0x8] sm:$0xff]
        %v314 = vld [vmem:[%s248 + $0x10] sm:$0xff]
        %v315 = vld [vmem:[%s248 + $0x18] sm:$0xff]
        %v316 = vld [vmem:[%s248 + $0x20] sm:$0xff]
        %v317 = vld [vmem:[%s248 + $0x28] sm:$0xff]
        %v318 = vld [vmem:[%s248 + $0x30] sm:$0xff]
        %v319 = vld [vmem:[%s248 + $0x38] sm:$0xff]
        %v320 = vld [vmem:[%s248 + $0x40] sm:$0xff]
        %v321 = vld [vmem:[%s248 + $0x48] sm:$0xff]
        %v322 = vld [vmem:[%s248 + $0x50] sm:$0xff]
        %v323 = vld [vmem:[%s248 + $0x58] sm:$0xff]
        %v324 = vld [vmem:[%s248 + $0x60] sm:$0xff]
        %v325 = vld [vmem:[%s248 + $0x68] sm:$0xff]
        %v326 = vld [vmem:[%s248 + $0x70] sm:$0xff]
        %v327 = vld [vmem:[%s248 + $0x78] sm:$0xff]
        %v328 = vld [vmem:[%s248 + $0x80] sm:$0xff]
        %v329 = vld [vmem:[%s248 + $0x88] sm:$0xff]
        %v330 = vld [vmem:[%s248 + $0x90] sm:$0xff]
        %v331 = vld [vmem:[%s248 + $0x98] sm:$0xff]
        %v332 = vld [vmem:[%s248 + $0xa0] sm:$0xff]
        %v333 = vld [vmem:[%s248 + $0xa8] sm:$0xff]
        %v334 = vld [vmem:[%s248 + $0xb0] sm:$0xff]
        %v335 = vld [vmem:[%s248 + $0xb8] sm:$0xff]
        %v336 = vld [vmem:[%s248 + $0xc0] sm:$0xff]
        %v337 = vld [vmem:[%s248 + $0xc8] sm:$0xff]
        %v338 = vld [vmem:[%s248 + $0xd0] sm:$0xff]
        %v339 = vld [vmem:[%s248 + $0xd8] sm:$0xff]
        %v340 = vld [vmem:[%s248 + $0xe0] sm:$0xff]
        %v341 = vld [vmem:[%s248 + $0xe8] sm:$0xff]
        %v342 = vld [vmem:[%s248 + $0xf0] sm:$0xff]
        %v343 = vld [vmem:[%s248 + $0xf8] sm:$0xff]
        %v344 = vld [vmem:[%s1] sm:$0xff]
        %v345 = vld [vmem:[%s1 + $0x8] sm:$0xff]
        %v346 = vld [vmem:[%s1 + $0x10] sm:$0xff]
        %v347 = vld [vmem:[%s1 + $0x18] sm:$0xff]
        %v348 = vld [vmem:[%s1 + $0x20] sm:$0xff]
        %v349 = vld [vmem:[%s1 + $0x28] sm:$0xff]
        %v350 = vld [vmem:[%s1 + $0x30] sm:$0xff]
        %v351 = vld [vmem:[%s1 + $0x38] sm:$0xff]
        %v352 = vld [vmem:[%s1 + $0x40] sm:$0xff]
        %v353 = vld [vmem:[%s1 + $0x48] sm:$0xff]
        %v354 = vld [vmem:[%s1 + $0x50] sm:$0xff]
        %v355 = vld [vmem:[%s1 + $0x58] sm:$0xff]
        %v356 = vld [vmem:[%s1 + $0x60] sm:$0xff]
        %v357 = vld [vmem:[%s1 + $0x68] sm:$0xff]
        %v358 = vld [vmem:[%s1 + $0x70] sm:$0xff]
        %v359 = vld [vmem:[%s1 + $0x78] sm:$0xff]
        %v360 = vld [vmem:[%s2] sm:$0x1]
        %v362 = vlaneseq
        %v363 = vshrl.u32 %v362, 7
        %v364 = vsub.s32 0, %v363
        %v365 = vrot.slane %v360, %v364
        %367 = vmatprep.subr.mxu0 0.0
        %368 = vmatpush1.msra.mxu0 %v344
        %369 = vmatprep.subr.mxu0 0.0
        %370 = vmatpush1.msra.mxu0 %v345
        %371 = vmatprep.subr.mxu0 0.0
        %372 = vmatpush1.msra.mxu0 %v346
        %373 = vmatprep.subr.mxu0 0.0
        %374 = vmatpush1.msra.mxu0 %v347
        %375 = vmatprep.subr.mxu0 0.0
        %376 = vmatpush1.msra.mxu0 %v348
        %377 = vmatprep.subr.mxu0 0.0
        %378 = vmatpush1.msra.mxu0 %v349
        %379 = vmatprep.subr.mxu0 0.0
        %380 = vmatpush1.msra.mxu0 %v350
        %381 = vmatprep.subr.mxu0 0.0
        %382 = vmatpush1.msra.mxu0 %v351
        %383 = vmatprep.subr.mxu0 0.0
        %384 = vmatpush1.msra.mxu0 %v352
        %385 = vmatprep.subr.mxu0 0.0
        %386 = vmatpush1.msra.mxu0 %v353
        %387 = vmatprep.subr.mxu0 0.0
        %388 = vmatpush1.msra.mxu0 %v354
        %389 = vmatprep.subr.mxu0 0.0
        %390 = vmatpush1.msra.mxu0 %v355
        %391 = vmatprep.subr.mxu0 0.0
        %392 = vmatpush1.msra.mxu0 %v356
        %393 = vmatprep.subr.mxu0 0.0
        %394 = vmatpush1.msra.mxu0 %v357
        %395 = vmatprep.subr.mxu0 0.0
        %396 = vmatpush1.msra.mxu0 %v358
        %397 = vmatprep.subr.mxu0 0.0
        %398 = vmatpush1.msra.mxu0 %v359
        %399 = vmatprep.subr.mxu0 0.0
        %400 = vmatpush1.msra.mxu0 0.0
        %401 = vmatprep.subr.mxu0 0.0
        %402 = vmatpush1.msra.mxu0 0.0
        %403 = vmatprep.subr.mxu0 0.0
        %404 = vmatpush1.msra.mxu0 0.0
        %405 = vmatprep.subr.mxu0 0.0
        %406 = vmatpush1.msra.mxu0 0.0
        %407 = vmatprep.subr.mxu0 0.0
        %408 = vmatpush1.msra.mxu0 0.0
        %409 = vmatprep.subr.mxu0 0.0
        %410 = vmatpush1.msra.mxu0 0.0
        %411 = vmatprep.subr.mxu0 0.0
        %412 = vmatpush1.msra.mxu0 0.0
        %413 = vmatprep.subr.mxu0 0.0
        %414 = vmatpush1.msra.mxu0 0.0
        %415 = vmatprep.subr.mxu0 0.0
        %416 = vmatpush1.msra.mxu0 0.0
        %417 = vmatprep.subr.mxu0 0.0
        %418 = vmatpush1.msra.mxu0 0.0
        %419 = vmatprep.subr.mxu0 0.0
        %420 = vmatpush1.msra.mxu0 0.0
        %421 = vmatprep.subr.mxu0 0.0
        %422 = vmatpush1.msra.mxu0 0.0
        %423 = vmatprep.subr.mxu0 0.0
        %424 = vmatpush1.msra.mxu0 0.0
        %425 = vmatprep.subr.mxu0 0.0
        %426 = vmatpush1.msra.mxu0 0.0
        %427 = vmatprep.subr.mxu0 0.0
        %428 = vmatpush1.msra.mxu0 0.0
        %429 = vmatprep.subr.mxu0 0.0
        %430 = vmatpush1.msra.mxu0 0.0
        %431 = vmatprep.mubr.f32.mxu0 0.0
        %432 = vmatmul.mubr.f32.gmra.mrb[0].mxu0 %v312
        %v433 = vpop.f32.mrb[0].mxu0
        %v434 = vadd.f32 %v365, %v433
        %v435 = vpop.f32.mrb[0].mxu0
        %436 = vmatprep.mubr.f32.mxu0 0.0
        %437 = vmatmul.mubr.f32.gmra.mrb[0].mxu0 %v313
        %v438 = vpop.f32.mrb[0].mxu0
        %v439 = vadd.f32 %v365, %v438
        %v440 = vpop.f32.mrb[0].mxu0
        %441 = vmatprep.mubr.f32.mxu0 0.0
        %442 = vmatmul.mubr.f32.gmra.mrb[0].mxu0 %v314
        %v443 = vpop.f32.mrb[0].mxu0
        %v444 = vadd.f32 %v365, %v443
        %v445 = vpop.f32.mrb[0].mxu0
        %446 = vmatprep.mubr.f32.mxu0 0.0
        %447 = vmatmul.mubr.f32.gmra.mrb[0].mxu0 %v315
        %v448 = vpop.f32.mrb[0].mxu0
        %v449 = vadd.f32 %v365, %v448
        %v450 = vpop.f32.mrb[0].mxu0
        %451 = vmatprep.mubr.f32.mxu0 0.0
        %452 = vmatmul.mubr.f32.gmra.mrb[0].mxu0 %v316
        %v453 = vpop.f32.mrb[0].mxu0
        %v454 = vadd.f32 %v365, %v453
        %v455 = vpop.f32.mrb[0].mxu0
        %456 = vmatprep.mubr.f32.mxu0 0.0
        %457 = vmatmul.mubr.f32.gmra.mrb[0].mxu0 %v317
        %v458 = vpop.f32.mrb[0].mxu0
        %v459 = vadd.f32 %v365, %v458
        %v460 = vpop.f32.mrb[0].mxu0
        %461 = vmatprep.mubr.f32.mxu0 0.0
        %462 = vmatmul.mubr.f32.gmra.mrb[0].mxu0 %v318
        %v463 = vpop.f32.mrb[0].mxu0
        %v464 = vadd.f32 %v365, %v463
        %v465 = vpop.f32.mrb[0].mxu0
        %466 = vmatprep.mubr.f32.mxu0 0.0
        %467 = vmatmul.mubr.f32.gmra.mrb[0].mxu0 %v319
        %v468 = vpop.f32.mrb[0].mxu0
        %v469 = vadd.f32 %v365, %v468
        %v470 = vpop.f32.mrb[0].mxu0
        %471 = vmatprep.mubr.f32.mxu0 0.0
        %472 = vmatmul.mubr.f32.gmra.mrb[0].mxu0 %v320
        %v473 = vpop.f32.mrb[0].mxu0
        %v474 = vadd.f32 %v365, %v473
        %v475 = vpop.f32.mrb[0].mxu0
        %476 = vmatprep.mubr.f32.mxu0 0.0
        %477 = vmatmul.mubr.f32.gmra.mrb[0].mxu0 %v321
        %v478 = vpop.f32.mrb[0].mxu0
        %v479 = vadd.f32 %v365, %v478
        %v480 = vpop.f32.mrb[0].mxu0
        %481 = vmatprep.mubr.f32.mxu0 0.0
        %482 = vmatmul.mubr.f32.gmra.mrb[0].mxu0 %v322
        %v483 = vpop.f32.mrb[0].mxu0
        %v484 = vadd.f32 %v365, %v483
        %v485 = vpop.f32.mrb[0].mxu0
        %486 = vmatprep.mubr.f32.mxu0 0.0
        %487 = vmatmul.mubr.f32.gmra.mrb[0].mxu0 %v323
        %v488 = vpop.f32.mrb[0].mxu0
        %v489 = vadd.f32 %v365, %v488
        %v490 = vpop.f32.mrb[0].mxu0
        %491 = vmatprep.mubr.f32.mxu0 0.0
        %492 = vmatmul.mubr.f32.gmra.mrb[0].mxu0 %v324
        %v493 = vpop.f32.mrb[0].mxu0
        %v494 = vadd.f32 %v365, %v493
        %v495 = vpop.f32.mrb[0].mxu0
        %496 = vmatprep.mubr.f32.mxu0 0.0
        %497 = vmatmul.mubr.f32.gmra.mrb[0].mxu0 %v325
        %v498 = vpop.f32.mrb[0].mxu0
        %v499 = vadd.f32 %v365, %v498
        %v500 = vpop.f32.mrb[0].mxu0
        %501 = vmatprep.mubr.f32.mxu0 0.0
        %502 = vmatmul.mubr.f32.gmra.mrb[0].mxu0 %v326
        %v503 = vpop.f32.mrb[0].mxu0
        %v504 = vadd.f32 %v365, %v503
        %v505 = vpop.f32.mrb[0].mxu0
        %506 = vmatprep.mubr.f32.mxu0 0.0
        %507 = vmatmul.mubr.f32.gmra.mrb[0].mxu0 %v327
        %v508 = vpop.f32.mrb[0].mxu0
        %v509 = vadd.f32 %v365, %v508
        %v510 = vpop.f32.mrb[0].mxu0
        %511 = vmatprep.mubr.f32.mxu0 0.0
        %512 = vmatmul.mubr.f32.gmra.mrb[0].mxu0 %v328
        %v513 = vpop.f32.mrb[0].mxu0
        %v514 = vadd.f32 %v365, %v513
        %v515 = vpop.f32.mrb[0].mxu0
        %516 = vmatprep.mubr.f32.mxu0 0.0
        %517 = vmatmul.mubr.f32.gmra.mrb[0].mxu0 %v329
        %v518 = vpop.f32.mrb[0].mxu0
        %v519 = vadd.f32 %v365, %v518
        %v520 = vpop.f32.mrb[0].mxu0
        %521 = vmatprep.mubr.f32.mxu0 0.0
        %522 = vmatmul.mubr.f32.gmra.mrb[0].mxu0 %v330
        %v523 = vpop.f32.mrb[0].mxu0
        %v524 = vadd.f32 %v365, %v523
        %v525 = vpop.f32.mrb[0].mxu0
        %526 = vmatprep.mubr.f32.mxu0 0.0
        %527 = vmatmul.mubr.f32.gmra.mrb[0].mxu0 %v331
        %v528 = vpop.f32.mrb[0].mxu0
        %v529 = vadd.f32 %v365, %v528
        %v530 = vpop.f32.mrb[0].mxu0
        %531 = vmatprep.mubr.f32.mxu0 0.0
        %532 = vmatmul.mubr.f32.gmra.mrb[0].mxu0 %v332
        %v533 = vpop.f32.mrb[0].mxu0
        %v534 = vadd.f32 %v365, %v533
        %v535 = vpop.f32.mrb[0].mxu0
        %536 = vmatprep.mubr.f32.mxu0 0.0
        %537 = vmatmul.mubr.f32.gmra.mrb[0].mxu0 %v333
        %v538 = vpop.f32.mrb[0].mxu0
        %v539 = vadd.f32 %v365, %v538
        %v540 = vpop.f32.mrb[0].mxu0
        %541 = vmatprep.mubr.f32.mxu0 0.0
        %542 = vmatmul.mubr.f32.gmra.mrb[0].mxu0 %v334
        %v543 = vpop.f32.mrb[0].mxu0
        %v544 = vadd.f32 %v365, %v543
        %v545 = vpop.f32.mrb[0].mxu0
        %546 = vmatprep.mubr.f32.mxu0 0.0
        %547 = vmatmul.mubr.f32.gmra.mrb[0].mxu0 %v335
        %v548 = vpop.f32.mrb[0].mxu0
        %v549 = vadd.f32 %v365, %v548
        %v550 = vpop.f32.mrb[0].mxu0
        %551 = vmatprep.mubr.f32.mxu0 0.0
        %552 = vmatmul.mubr.f32.gmra.mrb[0].mxu0 %v336
        %v553 = vpop.f32.mrb[0].mxu0
        %v554 = vadd.f32 %v365, %v553
        %v555 = vpop.f32.mrb[0].mxu0
        %556 = vmatprep.mubr.f32.mxu0 0.0
        %557 = vmatmul.mubr.f32.gmra.mrb[0].mxu0 %v337
        %v558 = vpop.f32.mrb[0].mxu0
        %v559 = vadd.f32 %v365, %v558
        %v560 = vpop.f32.mrb[0].mxu0
        %561 = vmatprep.mubr.f32.mxu0 0.0
        %562 = vmatmul.mubr.f32.gmra.mrb[0].mxu0 %v338
        %v563 = vpop.f32.mrb[0].mxu0
        %v564 = vadd.f32 %v365, %v563
        %v565 = vpop.f32.mrb[0].mxu0
        %566 = vmatprep.mubr.f32.mxu0 0.0
        %567 = vmatmul.mubr.f32.gmra.mrb[0].mxu0 %v339
        %v568 = vpop.f32.mrb[0].mxu0
        %v569 = vadd.f32 %v365, %v568
        %v570 = vpop.f32.mrb[0].mxu0
        %571 = vmatprep.mubr.f32.mxu0 0.0
        %572 = vmatmul.mubr.f32.gmra.mrb[0].mxu0 %v340
        %v573 = vpop.f32.mrb[0].mxu0
        %v574 = vadd.f32 %v365, %v573
        %v575 = vpop.f32.mrb[0].mxu0
        %576 = vmatprep.mubr.f32.mxu0 0.0
        %577 = vmatmul.mubr.f32.gmra.mrb[0].mxu0 %v341
        %v578 = vpop.f32.mrb[0].mxu0
        %v579 = vadd.f32 %v365, %v578
        %v580 = vpop.f32.mrb[0].mxu0
        %581 = vmatprep.mubr.f32.mxu0 0.0
        %582 = vmatmul.mubr.f32.gmra.mrb[0].mxu0 %v342
        %v583 = vpop.f32.mrb[0].mxu0
        %v584 = vadd.f32 %v365, %v583
        %v585 = vpop.f32.mrb[0].mxu0
        %586 = vmatprep.mubr.f32.mxu0 0.0
        %587 = vmatmul.mubr.f32.gmra.mrb[0].mxu0 %v343
        %v588 = vpop.f32.mrb[0].mxu0
        %v589 = vadd.f32 %v365, %v588
        %v590 = vpop.f32.mrb[0].mxu0
        %591 = vdwg.mxu0
        %v592 = vmul.f32 %v434, %v434
        %v593 = vmul.f32 %v439, %v439
        %v594 = vmul.f32 %v444, %v444
        %v595 = vmul.f32 %v449, %v449
        %v596 = vmul.f32 %v454, %v454
        %v597 = vmul.f32 %v459, %v459
        %v598 = vmul.f32 %v464, %v464
        %v599 = vmul.f32 %v469, %v469
        %v600 = vmul.f32 %v474, %v474
        %v601 = vmul.f32 %v479, %v479
        %v602 = vmul.f32 %v484, %v484
        %v603 = vmul.f32 %v489, %v489
        %v604 = vmul.f32 %v494, %v494
        %v605 = vmul.f32 %v499, %v499
        %v606 = vmul.f32 %v504, %v504
        %v607 = vmul.f32 %v509, %v509
        %v608 = vmul.f32 %v514, %v514
        %v609 = vmul.f32 %v519, %v519
        %v610 = vmul.f32 %v524, %v524
        %v611 = vmul.f32 %v529, %v529
        %v612 = vmul.f32 %v534, %v534
        %v613 = vmul.f32 %v539, %v539
        %v614 = vmul.f32 %v544, %v544
        %v615 = vmul.f32 %v549, %v549
        %v616 = vmul.f32 %v554, %v554
        %v617 = vmul.f32 %v559, %v559
        %v618 = vmul.f32 %v564, %v564
        %v619 = vmul.f32 %v569, %v569
        %v620 = vmul.f32 %v574, %v574
        %v621 = vmul.f32 %v579, %v579
        %v622 = vmul.f32 %v584, %v584
        %v623 = vmul.f32 %v589, %v589
        %vm624 = vcmask 15360
        %v625 = vsel %vm624, %v592, 0.0
        %626 = vadd.xlane.f32.xlu0 %v625
        %v627 = vpop.xlane.xlu0 %626
        %v628 = vsel %vm624, %v593, 0.0
        %629 = vadd.xlane.f32.xlu0 %v628
        %v630 = vpop.xlane.xlu0 %629
        %v631 = vsel %vm624, %v594, 0.0
        %632 = vadd.xlane.f32.xlu0 %v631
        %v633 = vpop.xlane.xlu0 %632
        %v634 = vsel %vm624, %v595, 0.0
        %635 = vadd.xlane.f32.xlu0 %v634
        %v636 = vpop.xlane.xlu0 %635
        %v637 = vsel %vm624, %v596, 0.0
        %638 = vadd.xlane.f32.xlu0 %v637
        %v639 = vpop.xlane.xlu0 %638
        %v640 = vsel %vm624, %v597, 0.0
        %641 = vadd.xlane.f32.xlu0 %v640
        %v642 = vpop.xlane.xlu0 %641
        %v643 = vsel %vm624, %v598, 0.0
        %644 = vadd.xlane.f32.xlu0 %v643
        %v645 = vpop.xlane.xlu0 %644
        %v646 = vsel %vm624, %v599, 0.0
        %647 = vadd.xlane.f32.xlu0 %v646
        %v648 = vpop.xlane.xlu0 %647
        %v649 = vsel %vm624, %v600, 0.0
        %650 = vadd.xlane.f32.xlu0 %v649
        %v651 = vpop.xlane.xlu0 %650
        %v652 = vsel %vm624, %v601, 0.0
        %653 = vadd.xlane.f32.xlu0 %v652
        %v654 = vpop.xlane.xlu0 %653
        %v655 = vsel %vm624, %v602, 0.0
        %656 = vadd.xlane.f32.xlu0 %v655
        %v657 = vpop.xlane.xlu0 %656
        %v658 = vsel %vm624, %v603, 0.0
        %659 = vadd.xlane.f32.xlu0 %v658
        %v660 = vpop.xlane.xlu0 %659
        %v661 = vsel %vm624, %v604, 0.0
        %662 = vadd.xlane.f32.xlu0 %v661
        %v663 = vpop.xlane.xlu0 %662
        %v664 = vsel %vm624, %v605, 0.0
        %665 = vadd.xlane.f32.xlu0 %v664
        %v666 = vpop.xlane.xlu0 %665
        %v667 = vsel %vm624, %v606, 0.0
        %668 = vadd.xlane.f32.xlu0 %v667
        %v669 = vpop.xlane.xlu0 %668
        %v670 = vsel %vm624, %v607, 0.0
        %671 = vadd.xlane.f32.xlu0 %v670
        %v672 = vpop.xlane.xlu0 %671
        %v673 = vsel %vm624, %v608, 0.0
        %674 = vadd.xlane.f32.xlu0 %v673
        %v675 = vpop.xlane.xlu0 %674
        %v676 = vsel %vm624, %v609, 0.0
        %677 = vadd.xlane.f32.xlu0 %v676
        %v678 = vpop.xlane.xlu0 %677
        %v679 = vsel %vm624, %v610, 0.0
        %680 = vadd.xlane.f32.xlu0 %v679
        %v681 = vpop.xlane.xlu0 %680
        %v682 = vsel %vm624, %v611, 0.0
        %683 = vadd.xlane.f32.xlu0 %v682
        %v684 = vpop.xlane.xlu0 %683
        %v685 = vsel %vm624, %v612, 0.0
        %686 = vadd.xlane.f32.xlu0 %v685
        %v687 = vpop.xlane.xlu0 %686
        %v688 = vsel %vm624, %v613, 0.0
        %689 = vadd.xlane.f32.xlu0 %v688
        %v690 = vpop.xlane.xlu0 %689
        %v691 = vsel %vm624, %v614, 0.0
        %692 = vadd.xlane.f32.xlu0 %v691
        %v693 = vpop.xlane.xlu0 %692
        %v694 = vsel %vm624, %v615, 0.0
        %695 = vadd.xlane.f32.xlu0 %v694
        %v696 = vpop.xlane.xlu0 %695
        %v697 = vsel %vm624, %v616, 0.0
        %698 = vadd.xlane.f32.xlu0 %v697
        %v699 = vpop.xlane.xlu0 %698
        %v700 = vsel %vm624, %v617, 0.0
        %701 = vadd.xlane.f32.xlu0 %v700
        %v702 = vpop.xlane.xlu0 %701
        %v703 = vsel %vm624, %v618, 0.0
        %704 = vadd.xlane.f32.xlu0 %v703
        %v705 = vpop.xlane.xlu0 %704
        %v706 = vsel %vm624, %v619, 0.0
        %707 = vadd.xlane.f32.xlu0 %v706
        %v708 = vpop.xlane.xlu0 %707
        %v709 = vsel %vm624, %v620, 0.0
        %710 = vadd.xlane.f32.xlu0 %v709
        %v711 = vpop.xlane.xlu0 %710
        %v712 = vsel %vm624, %v621, 0.0
        %713 = vadd.xlane.f32.xlu0 %v712
        %v714 = vpop.xlane.xlu0 %713
        %v715 = vsel %vm624, %v622, 0.0
        %716 = vadd.xlane.f32.xlu0 %v715
        %v717 = vpop.xlane.xlu0 %716
        %v718 = vsel %vm624, %v623, 0.0
        %719 = vadd.xlane.f32.xlu0 %v718
        %v720 = vpop.xlane.xlu0 %719
        %v721 = vrsqrt.pop %v627
        %v722 = vmul.f32 %v627, %v721
        %vm723 = vcmp.eq.f32.partialorder %v627, inf
        %v724 = vsel %vm723, %v627, %v722
        %vm725 = vcmp.eq.f32.partialorder %v627, 0.0
        %v726 = vand.u32 %v627, 2147483648
        %v727 = vsel %vm725, %v726, %v724
        %v728 = vrsqrt.pop %v630
        %v729 = vmul.f32 %v630, %v728
        %vm730 = vcmp.eq.f32.partialorder %v630, inf
        %v731 = vsel %vm730, %v630, %v729
        %vm732 = vcmp.eq.f32.partialorder %v630, 0.0
        %v733 = vand.u32 %v630, 2147483648
        %v734 = vsel %vm732, %v733, %v731
        %v735 = vrsqrt.pop %v633
        %v736 = vmul.f32 %v633, %v735
        %vm737 = vcmp.eq.f32.partialorder %v633, inf
        %v738 = vsel %vm737, %v633, %v736
        %vm739 = vcmp.eq.f32.partialorder %v633, 0.0
        %v740 = vand.u32 %v633, 2147483648
        %v741 = vsel %vm739, %v740, %v738
        %v742 = vrsqrt.pop %v636
        %v743 = vmul.f32 %v636, %v742
        %vm744 = vcmp.eq.f32.partialorder %v636, inf
        %v745 = vsel %vm744, %v636, %v743
        %vm746 = vcmp.eq.f32.partialorder %v636, 0.0
        %v747 = vand.u32 %v636, 2147483648
        %v748 = vsel %vm746, %v747, %v745
        %v749 = vrsqrt.pop %v639
        %v750 = vmul.f32 %v639, %v749
        %vm751 = vcmp.eq.f32.partialorder %v639, inf
        %v752 = vsel %vm751, %v639, %v750
        %vm753 = vcmp.eq.f32.partialorder %v639, 0.0
        %v754 = vand.u32 %v639, 2147483648
        %v755 = vsel %vm753, %v754, %v752
        %v756 = vrsqrt.pop %v642
        %v757 = vmul.f32 %v642, %v756
        %vm758 = vcmp.eq.f32.partialorder %v642, inf
        %v759 = vsel %vm758, %v642, %v757
        %vm760 = vcmp.eq.f32.partialorder %v642, 0.0
        %v761 = vand.u32 %v642, 2147483648
        %v762 = vsel %vm760, %v761, %v759
        %v763 = vrsqrt.pop %v645
        %v764 = vmul.f32 %v645, %v763
        %vm765 = vcmp.eq.f32.partialorder %v645, inf
        %v766 = vsel %vm765, %v645, %v764
        %vm767 = vcmp.eq.f32.partialorder %v645, 0.0
        %v768 = vand.u32 %v645, 2147483648
        %v769 = vsel %vm767, %v768, %v766
        %v770 = vrsqrt.pop %v648
        %v771 = vmul.f32 %v648, %v770
        %vm772 = vcmp.eq.f32.partialorder %v648, inf
        %v773 = vsel %vm772, %v648, %v771
        %vm774 = vcmp.eq.f32.partialorder %v648, 0.0
        %v775 = vand.u32 %v648, 2147483648
        %v776 = vsel %vm774, %v775, %v773
        %v777 = vrsqrt.pop %v651
        %v778 = vmul.f32 %v651, %v777
        %vm779 = vcmp.eq.f32.partialorder %v651, inf
        %v780 = vsel %vm779, %v651, %v778
        %vm781 = vcmp.eq.f32.partialorder %v651, 0.0
        %v782 = vand.u32 %v651, 2147483648
        %v783 = vsel %vm781, %v782, %v780
        %v784 = vrsqrt.pop %v654
        %v785 = vmul.f32 %v654, %v784
        %vm786 = vcmp.eq.f32.partialorder %v654, inf
        %v787 = vsel %vm786, %v654, %v785
        %vm788 = vcmp.eq.f32.partialorder %v654, 0.0
        %v789 = vand.u32 %v654, 2147483648
        %v790 = vsel %vm788, %v789, %v787
        %v791 = vrsqrt.pop %v657
        %v792 = vmul.f32 %v657, %v791
        %vm793 = vcmp.eq.f32.partialorder %v657, inf
        %v794 = vsel %vm793, %v657, %v792
        %vm795 = vcmp.eq.f32.partialorder %v657, 0.0
        %v796 = vand.u32 %v657, 2147483648
        %v797 = vsel %vm795, %v796, %v794
        %v798 = vrsqrt.pop %v660
        %v799 = vmul.f32 %v660, %v798
        %vm800 = vcmp.eq.f32.partialorder %v660, inf
        %v801 = vsel %vm800, %v660, %v799
        %vm802 = vcmp.eq.f32.partialorder %v660, 0.0
        %v803 = vand.u32 %v660, 2147483648
        %v804 = vsel %vm802, %v803, %v801
        %v805 = vrsqrt.pop %v663
        %v806 = vmul.f32 %v663, %v805
        %vm807 = vcmp.eq.f32.partialorder %v663, inf
        %v808 = vsel %vm807, %v663, %v806
        %vm809 = vcmp.eq.f32.partialorder %v663, 0.0
        %v810 = vand.u32 %v663, 2147483648
        %v811 = vsel %vm809, %v810, %v808
        %v812 = vrsqrt.pop %v666
        %v813 = vmul.f32 %v666, %v812
        %vm814 = vcmp.eq.f32.partialorder %v666, inf
        %v815 = vsel %vm814, %v666, %v813
        %vm816 = vcmp.eq.f32.partialorder %v666, 0.0
        %v817 = vand.u32 %v666, 2147483648
        %v818 = vsel %vm816, %v817, %v815
        %v819 = vrsqrt.pop %v669
        %v820 = vmul.f32 %v669, %v819
        %vm821 = vcmp.eq.f32.partialorder %v669, inf
        %v822 = vsel %vm821, %v669, %v820
        %vm823 = vcmp.eq.f32.partialorder %v669, 0.0
        %v824 = vand.u32 %v669, 2147483648
        %v825 = vsel %vm823, %v824, %v822
        %v826 = vrsqrt.pop %v672
        %v827 = vmul.f32 %v672, %v826
        %vm828 = vcmp.eq.f32.partialorder %v672, inf
        %v829 = vsel %vm828, %v672, %v827
        %vm830 = vcmp.eq.f32.partialorder %v672, 0.0
        %v831 = vand.u32 %v672, 2147483648
        %v832 = vsel %vm830, %v831, %v829
        %v833 = vrsqrt.pop %v675
        %v834 = vmul.f32 %v675, %v833
        %vm835 = vcmp.eq.f32.partialorder %v675, inf
        %v836 = vsel %vm835, %v675, %v834
        %vm837 = vcmp.eq.f32.partialorder %v675, 0.0
        %v838 = vand.u32 %v675, 2147483648
        %v839 = vsel %vm837, %v838, %v836
        %v840 = vrsqrt.pop %v678
        %v841 = vmul.f32 %v678, %v840
        %vm842 = vcmp.eq.f32.partialorder %v678, inf
        %v843 = vsel %vm842, %v678, %v841
        %vm844 = vcmp.eq.f32.partialorder %v678, 0.0
        %v845 = vand.u32 %v678, 2147483648
        %v846 = vsel %vm844, %v845, %v843
        %v847 = vrsqrt.pop %v681
        %v848 = vmul.f32 %v681, %v847
        %vm849 = vcmp.eq.f32.partialorder %v681, inf
        %v850 = vsel %vm849, %v681, %v848
        %vm851 = vcmp.eq.f32.partialorder %v681, 0.0
        %v852 = vand.u32 %v681, 2147483648
        %v853 = vsel %vm851, %v852, %v850
        %v854 = vrsqrt.pop %v684
        %v855 = vmul.f32 %v684, %v854
        %vm856 = vcmp.eq.f32.partialorder %v684, inf
        %v857 = vsel %vm856, %v684, %v855
        %vm858 = vcmp.eq.f32.partialorder %v684, 0.0
        %v859 = vand.u32 %v684, 2147483648
        %v860 = vsel %vm858, %v859, %v857
        %v861 = vrsqrt.pop %v687
        %v862 = vmul.f32 %v687, %v861
        %vm863 = vcmp.eq.f32.partialorder %v687, inf
        %v864 = vsel %vm863, %v687, %v862
        %vm865 = vcmp.eq.f32.partialorder %v687, 0.0
        %v866 = vand.u32 %v687, 2147483648
        %v867 = vsel %vm865, %v866, %v864
        %v868 = vrsqrt.pop %v690
        %v869 = vmul.f32 %v690, %v868
        %vm870 = vcmp.eq.f32.partialorder %v690, inf
        %v871 = vsel %vm870, %v690, %v869
        %vm872 = vcmp.eq.f32.partialorder %v690, 0.0
        %v873 = vand.u32 %v690, 2147483648
        %v874 = vsel %vm872, %v873, %v871
        %v875 = vrsqrt.pop %v693
        %v876 = vmul.f32 %v693, %v875
        %vm877 = vcmp.eq.f32.partialorder %v693, inf
        %v878 = vsel %vm877, %v693, %v876
        %vm879 = vcmp.eq.f32.partialorder %v693, 0.0
        %v880 = vand.u32 %v693, 2147483648
        %v881 = vsel %vm879, %v880, %v878
        %v882 = vrsqrt.pop %v696
        %v883 = vmul.f32 %v696, %v882
        %vm884 = vcmp.eq.f32.partialorder %v696, inf
        %v885 = vsel %vm884, %v696, %v883
        %vm886 = vcmp.eq.f32.partialorder %v696, 0.0
        %v887 = vand.u32 %v696, 2147483648
        %v888 = vsel %vm886, %v887, %v885
        %v889 = vrsqrt.pop %v699
        %v890 = vmul.f32 %v699, %v889
        %vm891 = vcmp.eq.f32.partialorder %v699, inf
        %v892 = vsel %vm891, %v699, %v890
        %vm893 = vcmp.eq.f32.partialorder %v699, 0.0
        %v894 = vand.u32 %v699, 2147483648
        %v895 = vsel %vm893, %v894, %v892
        %v896 = vrsqrt.pop %v702
        %v897 = vmul.f32 %v702, %v896
        %vm898 = vcmp.eq.f32.partialorder %v702, inf
        %v899 = vsel %vm898, %v702, %v897
        %vm900 = vcmp.eq.f32.partialorder %v702, 0.0
        %v901 = vand.u32 %v702, 2147483648
        %v902 = vsel %vm900, %v901, %v899
        %v903 = vrsqrt.pop %v705
        %v904 = vmul.f32 %v705, %v903
        %vm905 = vcmp.eq.f32.partialorder %v705, inf
        %v906 = vsel %vm905, %v705, %v904
        %vm907 = vcmp.eq.f32.partialorder %v705, 0.0
        %v908 = vand.u32 %v705, 2147483648
        %v909 = vsel %vm907, %v908, %v906
        %v910 = vrsqrt.pop %v708
        %v911 = vmul.f32 %v708, %v910
        %vm912 = vcmp.eq.f32.partialorder %v708, inf
        %v913 = vsel %vm912, %v708, %v911
        %vm914 = vcmp.eq.f32.partialorder %v708, 0.0
        %v915 = vand.u32 %v708, 2147483648
        %v916 = vsel %vm914, %v915, %v913
        %v917 = vrsqrt.pop %v711
        %v918 = vmul.f32 %v711, %v917
        %vm919 = vcmp.eq.f32.partialorder %v711, inf
        %v920 = vsel %vm919, %v711, %v918
        %vm921 = vcmp.eq.f32.partialorder %v711, 0.0
        %v922 = vand.u32 %v711, 2147483648
        %v923 = vsel %vm921, %v922, %v920
        %v924 = vrsqrt.pop %v714
        %v925 = vmul.f32 %v714, %v924
        %vm926 = vcmp.eq.f32.partialorder %v714, inf
        %v927 = vsel %vm926, %v714, %v925
        %vm928 = vcmp.eq.f32.partialorder %v714, 0.0
        %v929 = vand.u32 %v714, 2147483648
        %v930 = vsel %vm928, %v929, %v927
        %v931 = vrsqrt.pop %v717
        %v932 = vmul.f32 %v717, %v931
        %vm933 = vcmp.eq.f32.partialorder %v717, inf
        %v934 = vsel %vm933, %v717, %v932
        %vm935 = vcmp.eq.f32.partialorder %v717, 0.0
        %v936 = vand.u32 %v717, 2147483648
        %v937 = vsel %vm935, %v936, %v934
        %v938 = vrsqrt.pop %v720
        %v939 = vmul.f32 %v720, %v938
        %vm940 = vcmp.eq.f32.partialorder %v720, inf
        %v941 = vsel %vm940, %v720, %v939
        %vm942 = vcmp.eq.f32.partialorder %v720, 0.0
        %v943 = vand.u32 %v720, 2147483648
        %v944 = vsel %vm942, %v943, %v941
        %v945 = vrot.slane %v727, 4
        %v946 = vadd.f32 %v727, %v945
        %v947 = vrot.slane %v946, 2
        %v948 = vadd.f32 %v946, %v947
        %v949 = vrot.slane %v948, 1
        %v950 = vadd.f32 %v948, %v949
        %v951 = vrot.slane %v734, 4
        %v952 = vadd.f32 %v734, %v951
        %v953 = vrot.slane %v952, 2
        %v954 = vadd.f32 %v952, %v953
        %v955 = vrot.slane %v954, 1
        %v956 = vadd.f32 %v954, %v955
        %v957 = vrot.slane %v741, 4
        %v958 = vadd.f32 %v741, %v957
        %v959 = vrot.slane %v958, 2
        %v960 = vadd.f32 %v958, %v959
        %v961 = vrot.slane %v960, 1
        %v962 = vadd.f32 %v960, %v961
        %v963 = vrot.slane %v748, 4
        %v964 = vadd.f32 %v748, %v963
        %v965 = vrot.slane %v964, 2
        %v966 = vadd.f32 %v964, %v965
        %v967 = vrot.slane %v966, 1
        %v968 = vadd.f32 %v966, %v967
        %v969 = vrot.slane %v755, 4
        %v970 = vadd.f32 %v755, %v969
        %v971 = vrot.slane %v970, 2
        %v972 = vadd.f32 %v970, %v971
        %v973 = vrot.slane %v972, 1
        %v974 = vadd.f32 %v972, %v973
        %v975 = vrot.slane %v762, 4
        %v976 = vadd.f32 %v762, %v975
        %v977 = vrot.slane %v976, 2
        %v978 = vadd.f32 %v976, %v977
        %v979 = vrot.slane %v978, 1
        %v980 = vadd.f32 %v978, %v979
        %v981 = vrot.slane %v769, 4
        %v982 = vadd.f32 %v769, %v981
        %v983 = vrot.slane %v982, 2
        %v984 = vadd.f32 %v982, %v983
        %v985 = vrot.slane %v984, 1
        %v986 = vadd.f32 %v984, %v985
        %v987 = vrot.slane %v776, 4
        %v988 = vadd.f32 %v776, %v987
        %v989 = vrot.slane %v988, 2
        %v990 = vadd.f32 %v988, %v989
        %v991 = vrot.slane %v990, 1
        %v992 = vadd.f32 %v990, %v991
        %v993 = vrot.slane %v783, 4
        %v994 = vadd.f32 %v783, %v993
        %v995 = vrot.slane %v994, 2
        %v996 = vadd.f32 %v994, %v995
        %v997 = vrot.slane %v996, 1
        %v998 = vadd.f32 %v996, %v997
        %v999 = vrot.slane %v790, 4
        %v1000 = vadd.f32 %v790, %v999
        %v1001 = vrot.slane %v1000, 2
        %v1002 = vadd.f32 %v1000, %v1001
        %v1003 = vrot.slane %v1002, 1
        %v1004 = vadd.f32 %v1002, %v1003
        %v1005 = vrot.slane %v797, 4
        %v1006 = vadd.f32 %v797, %v1005
        %v1007 = vrot.slane %v1006, 2
        %v1008 = vadd.f32 %v1006, %v1007
        %v1009 = vrot.slane %v1008, 1
        %v1010 = vadd.f32 %v1008, %v1009
        %v1011 = vrot.slane %v804, 4
        %v1012 = vadd.f32 %v804, %v1011
        %v1013 = vrot.slane %v1012, 2
        %v1014 = vadd.f32 %v1012, %v1013
        %v1015 = vrot.slane %v1014, 1
        %v1016 = vadd.f32 %v1014, %v1015
        %v1017 = vrot.slane %v811, 4
        %v1018 = vadd.f32 %v811, %v1017
        %v1019 = vrot.slane %v1018, 2
        %v1020 = vadd.f32 %v1018, %v1019
        %v1021 = vrot.slane %v1020, 1
        %v1022 = vadd.f32 %v1020, %v1021
        %v1023 = vrot.slane %v818, 4
        %v1024 = vadd.f32 %v818, %v1023
        %v1025 = vrot.slane %v1024, 2
        %v1026 = vadd.f32 %v1024, %v1025
        %v1027 = vrot.slane %v1026, 1
        %v1028 = vadd.f32 %v1026, %v1027
        %v1029 = vrot.slane %v825, 4
        %v1030 = vadd.f32 %v825, %v1029
        %v1031 = vrot.slane %v1030, 2
        %v1032 = vadd.f32 %v1030, %v1031
        %v1033 = vrot.slane %v1032, 1
        %v1034 = vadd.f32 %v1032, %v1033
        %v1035 = vrot.slane %v832, 4
        %v1036 = vadd.f32 %v832, %v1035
        %v1037 = vrot.slane %v1036, 2
        %v1038 = vadd.f32 %v1036, %v1037
        %v1039 = vrot.slane %v1038, 1
        %v1040 = vadd.f32 %v1038, %v1039
        %v1041 = vrot.slane %v839, 4
        %v1042 = vadd.f32 %v839, %v1041
        %v1043 = vrot.slane %v1042, 2
        %v1044 = vadd.f32 %v1042, %v1043
        %v1045 = vrot.slane %v1044, 1
        %v1046 = vadd.f32 %v1044, %v1045
        %v1047 = vrot.slane %v846, 4
        %v1048 = vadd.f32 %v846, %v1047
        %v1049 = vrot.slane %v1048, 2
        %v1050 = vadd.f32 %v1048, %v1049
        %v1051 = vrot.slane %v1050, 1
        %v1052 = vadd.f32 %v1050, %v1051
        %v1053 = vrot.slane %v853, 4
        %v1054 = vadd.f32 %v853, %v1053
        %v1055 = vrot.slane %v1054, 2
        %v1056 = vadd.f32 %v1054, %v1055
        %v1057 = vrot.slane %v1056, 1
        %v1058 = vadd.f32 %v1056, %v1057
        %v1059 = vrot.slane %v860, 4
        %v1060 = vadd.f32 %v860, %v1059
        %v1061 = vrot.slane %v1060, 2
        %v1062 = vadd.f32 %v1060, %v1061
        %v1063 = vrot.slane %v1062, 1
        %v1064 = vadd.f32 %v1062, %v1063
        %v1065 = vrot.slane %v867, 4
        %v1066 = vadd.f32 %v867, %v1065
        %v1067 = vrot.slane %v1066, 2
        %v1068 = vadd.f32 %v1066, %v1067
        %v1069 = vrot.slane %v1068, 1
        %v1070 = vadd.f32 %v1068, %v1069
        %v1071 = vrot.slane %v874, 4
        %v1072 = vadd.f32 %v874, %v1071
        %v1073 = vrot.slane %v1072, 2
        %v1074 = vadd.f32 %v1072, %v1073
        %v1075 = vrot.slane %v1074, 1
        %v1076 = vadd.f32 %v1074, %v1075
        %v1077 = vrot.slane %v881, 4
        %v1078 = vadd.f32 %v881, %v1077
        %v1079 = vrot.slane %v1078, 2
        %v1080 = vadd.f32 %v1078, %v1079
        %v1081 = vrot.slane %v1080, 1
        %v1082 = vadd.f32 %v1080, %v1081
        %v1083 = vrot.slane %v888, 4
        %v1084 = vadd.f32 %v888, %v1083
        %v1085 = vrot.slane %v1084, 2
        %v1086 = vadd.f32 %v1084, %v1085
        %v1087 = vrot.slane %v1086, 1
        %v1088 = vadd.f32 %v1086, %v1087
        %v1089 = vrot.slane %v895, 4
        %v1090 = vadd.f32 %v895, %v1089
        %v1091 = vrot.slane %v1090, 2
        %v1092 = vadd.f32 %v1090, %v1091
        %v1093 = vrot.slane %v1092, 1
        %v1094 = vadd.f32 %v1092, %v1093
        %v1095 = vrot.slane %v902, 4
        %v1096 = vadd.f32 %v902, %v1095
        %v1097 = vrot.slane %v1096, 2
        %v1098 = vadd.f32 %v1096, %v1097
        %v1099 = vrot.slane %v1098, 1
        %v1100 = vadd.f32 %v1098, %v1099
        %v1101 = vrot.slane %v909, 4
        %v1102 = vadd.f32 %v909, %v1101
        %v1103 = vrot.slane %v1102, 2
        %v1104 = vadd.f32 %v1102, %v1103
        %v1105 = vrot.slane %v1104, 1
        %v1106 = vadd.f32 %v1104, %v1105
        %v1107 = vrot.slane %v916, 4
        %v1108 = vadd.f32 %v916, %v1107
        %v1109 = vrot.slane %v1108, 2
        %v1110 = vadd.f32 %v1108, %v1109
        %v1111 = vrot.slane %v1110, 1
        %v1112 = vadd.f32 %v1110, %v1111
        %v1113 = vrot.slane %v923, 4
        %v1114 = vadd.f32 %v923, %v1113
        %v1115 = vrot.slane %v1114, 2
        %v1116 = vadd.f32 %v1114, %v1115
        %v1117 = vrot.slane %v1116, 1
        %v1118 = vadd.f32 %v1116, %v1117
        %v1119 = vrot.slane %v930, 4
        %v1120 = vadd.f32 %v930, %v1119
        %v1121 = vrot.slane %v1120, 2
        %v1122 = vadd.f32 %v1120, %v1121
        %v1123 = vrot.slane %v1122, 1
        %v1124 = vadd.f32 %v1122, %v1123
        %v1125 = vrot.slane %v937, 4
        %v1126 = vadd.f32 %v937, %v1125
        %v1127 = vrot.slane %v1126, 2
        %v1128 = vadd.f32 %v1126, %v1127
        %v1129 = vrot.slane %v1128, 1
        %v1130 = vadd.f32 %v1128, %v1129
        %v1131 = vrot.slane %v944, 4
        %v1132 = vadd.f32 %v944, %v1131
        %v1133 = vrot.slane %v1132, 2
        %v1134 = vadd.f32 %v1132, %v1133
        %v1135 = vrot.slane %v1134, 1
        %v1136 = vadd.f32 %v1134, %v1135
        %v1137 = vrcp.pop %v950
        %v1138 = vmul.f32 %v727, %v1137
        %v1139 = vrcp.pop %v956
        %v1140 = vmul.f32 %v734, %v1139
        %v1141 = vrcp.pop %v962
        %v1142 = vmul.f32 %v741, %v1141
        %v1143 = vrcp.pop %v968
        %v1144 = vmul.f32 %v748, %v1143
        %v1145 = vrcp.pop %v974
        %v1146 = vmul.f32 %v755, %v1145
        %v1147 = vrcp.pop %v980
        %v1148 = vmul.f32 %v762, %v1147
        %v1149 = vrcp.pop %v986
        %v1150 = vmul.f32 %v769, %v1149
        %v1151 = vrcp.pop %v992
        %v1152 = vmul.f32 %v776, %v1151
        %v1153 = vrcp.pop %v998
        %v1154 = vmul.f32 %v783, %v1153
        %v1155 = vrcp.pop %v1004
        %v1156 = vmul.f32 %v790, %v1155
        %v1157 = vrcp.pop %v1010
        %v1158 = vmul.f32 %v797, %v1157
        %v1159 = vrcp.pop %v1016
        %v1160 = vmul.f32 %v804, %v1159
        %v1161 = vrcp.pop %v1022
        %v1162 = vmul.f32 %v811, %v1161
        %v1163 = vrcp.pop %v1028
        %v1164 = vmul.f32 %v818, %v1163
        %v1165 = vrcp.pop %v1034
        %v1166 = vmul.f32 %v825, %v1165
        %v1167 = vrcp.pop %v1040
        %v1168 = vmul.f32 %v832, %v1167
        %v1169 = vrcp.pop %v1046
        %v1170 = vmul.f32 %v839, %v1169
        %v1171 = vrcp.pop %v1052
        %v1172 = vmul.f32 %v846, %v1171
        %v1173 = vrcp.pop %v1058
        %v1174 = vmul.f32 %v853, %v1173
        %v1175 = vrcp.pop %v1064
        %v1176 = vmul.f32 %v860, %v1175
        %v1177 = vrcp.pop %v1070
        %v1178 = vmul.f32 %v867, %v1177
        %v1179 = vrcp.pop %v1076
        %v1180 = vmul.f32 %v874, %v1179
        %v1181 = vrcp.pop %v1082
        %v1182 = vmul.f32 %v881, %v1181
        %v1183 = vrcp.pop %v1088
        %v1184 = vmul.f32 %v888, %v1183
        %v1185 = vrcp.pop %v1094
        %v1186 = vmul.f32 %v895, %v1185
        %v1187 = vrcp.pop %v1100
        %v1188 = vmul.f32 %v902, %v1187
        %v1189 = vrcp.pop %v1106
        %v1190 = vmul.f32 %v909, %v1189
        %v1191 = vrcp.pop %v1112
        %v1192 = vmul.f32 %v916, %v1191
        %v1193 = vrcp.pop %v1118
        %v1194 = vmul.f32 %v923, %v1193
        %v1195 = vrcp.pop %v1124
        %v1196 = vmul.f32 %v930, %v1195
        %v1197 = vrcp.pop %v1130
        %v1198 = vmul.f32 %v937, %v1197
        %v1199 = vrcp.pop %v1136
        %v1200 = vmul.f32 %v944, %v1199
        %v1201 = vsub.f32 %v1138, 0.0125
        %v1202 = vsub.f32 %v1140, 0.0125
        %v1203 = vsub.f32 %v1142, 0.0125
        %v1204 = vsub.f32 %v1144, 0.0125
        %v1205 = vsub.f32 %v1146, 0.0125
        %v1206 = vsub.f32 %v1148, 0.0125
        %v1207 = vsub.f32 %v1150, 0.0125
        %v1208 = vsub.f32 %v1152, 0.0125
        %v1209 = vsub.f32 %v1154, 0.0125
        %v1210 = vsub.f32 %v1156, 0.0125
        %v1211 = vsub.f32 %v1158, 0.0125
        %v1212 = vsub.f32 %v1160, 0.0125
        %v1213 = vsub.f32 %v1162, 0.0125
        %v1214 = vsub.f32 %v1164, 0.0125
        %v1215 = vsub.f32 %v1166, 0.0125
        %v1216 = vsub.f32 %v1168, 0.0125
        %v1217 = vsub.f32 %v1170, 0.0125
        %v1218 = vsub.f32 %v1172, 0.0125
        %v1219 = vsub.f32 %v1174, 0.0125
        %v1220 = vsub.f32 %v1176, 0.0125
        %v1221 = vsub.f32 %v1178, 0.0125
        %v1222 = vsub.f32 %v1180, 0.0125
        %v1223 = vsub.f32 %v1182, 0.0125
        %v1224 = vsub.f32 %v1184, 0.0125
        %v1225 = vsub.f32 %v1186, 0.0125
        %v1226 = vsub.f32 %v1188, 0.0125
        %v1227 = vsub.f32 %v1190, 0.0125
        %v1228 = vsub.f32 %v1192, 0.0125
        %v1229 = vsub.f32 %v1194, 0.0125
        %v1230 = vsub.f32 %v1196, 0.0125
        %v1231 = vsub.f32 %v1198, 0.0125
        %v1232 = vsub.f32 %v1200, 0.0125
        %v1233 = vmax.f32 %v1201, 0.0
        %v1234 = vmax.f32 %v1202, 0.0
        %v1235 = vmax.f32 %v1203, 0.0
        %v1236 = vmax.f32 %v1204, 0.0
        %v1237 = vmax.f32 %v1205, 0.0
        %v1238 = vmax.f32 %v1206, 0.0
        %v1239 = vmax.f32 %v1207, 0.0
        %v1240 = vmax.f32 %v1208, 0.0
        %v1241 = vmax.f32 %v1209, 0.0
        %v1242 = vmax.f32 %v1210, 0.0
        %v1243 = vmax.f32 %v1211, 0.0
        %v1244 = vmax.f32 %v1212, 0.0
        %v1245 = vmax.f32 %v1213, 0.0
        %v1246 = vmax.f32 %v1214, 0.0
        %v1247 = vmax.f32 %v1215, 0.0
        %v1248 = vmax.f32 %v1216, 0.0
        %v1249 = vmax.f32 %v1217, 0.0
        %v1250 = vmax.f32 %v1218, 0.0
        %v1251 = vmax.f32 %v1219, 0.0
        %v1252 = vmax.f32 %v1220, 0.0
        %v1253 = vmax.f32 %v1221, 0.0
        %v1254 = vmax.f32 %v1222, 0.0
        %v1255 = vmax.f32 %v1223, 0.0
        %v1256 = vmax.f32 %v1224, 0.0
        %v1257 = vmax.f32 %v1225, 0.0
        %v1258 = vmax.f32 %v1226, 0.0
        %v1259 = vmax.f32 %v1227, 0.0
        %v1260 = vmax.f32 %v1228, 0.0
        %v1261 = vmax.f32 %v1229, 0.0
        %v1262 = vmax.f32 %v1230, 0.0
        %v1263 = vmax.f32 %v1231, 0.0
        %v1264 = vmax.f32 %v1232, 0.0
        %v1265 = vrot.slane %v1233, 4
        %v1266 = vadd.f32 %v1233, %v1265
        %v1267 = vrot.slane %v1266, 2
        %v1268 = vadd.f32 %v1266, %v1267
        %v1269 = vrot.slane %v1268, 1
        %v1270 = vadd.f32 %v1268, %v1269
        %v1271 = vrot.slane %v1234, 4
        %v1272 = vadd.f32 %v1234, %v1271
        %v1273 = vrot.slane %v1272, 2
        %v1274 = vadd.f32 %v1272, %v1273
        %v1275 = vrot.slane %v1274, 1
        %v1276 = vadd.f32 %v1274, %v1275
        %v1277 = vrot.slane %v1235, 4
        %v1278 = vadd.f32 %v1235, %v1277
        %v1279 = vrot.slane %v1278, 2
        %v1280 = vadd.f32 %v1278, %v1279
        %v1281 = vrot.slane %v1280, 1
        %v1282 = vadd.f32 %v1280, %v1281
        %v1283 = vrot.slane %v1236, 4
        %v1284 = vadd.f32 %v1236, %v1283
        %v1285 = vrot.slane %v1284, 2
        %v1286 = vadd.f32 %v1284, %v1285
        %v1287 = vrot.slane %v1286, 1
        %v1288 = vadd.f32 %v1286, %v1287
        %v1289 = vrot.slane %v1237, 4
        %v1290 = vadd.f32 %v1237, %v1289
        %v1291 = vrot.slane %v1290, 2
        %v1292 = vadd.f32 %v1290, %v1291
        %v1293 = vrot.slane %v1292, 1
        %v1294 = vadd.f32 %v1292, %v1293
        %v1295 = vrot.slane %v1238, 4
        %v1296 = vadd.f32 %v1238, %v1295
        %v1297 = vrot.slane %v1296, 2
        %v1298 = vadd.f32 %v1296, %v1297
        %v1299 = vrot.slane %v1298, 1
        %v1300 = vadd.f32 %v1298, %v1299
        %v1301 = vrot.slane %v1239, 4
        %v1302 = vadd.f32 %v1239, %v1301
        %v1303 = vrot.slane %v1302, 2
        %v1304 = vadd.f32 %v1302, %v1303
        %v1305 = vrot.slane %v1304, 1
        %v1306 = vadd.f32 %v1304, %v1305
        %v1307 = vrot.slane %v1240, 4
        %v1308 = vadd.f32 %v1240, %v1307
        %v1309 = vrot.slane %v1308, 2
        %v1310 = vadd.f32 %v1308, %v1309
        %v1311 = vrot.slane %v1310, 1
        %v1312 = vadd.f32 %v1310, %v1311
        %v1313 = vrot.slane %v1241, 4
        %v1314 = vadd.f32 %v1241, %v1313
        %v1315 = vrot.slane %v1314, 2
        %v1316 = vadd.f32 %v1314, %v1315
        %v1317 = vrot.slane %v1316, 1
        %v1318 = vadd.f32 %v1316, %v1317
        %v1319 = vrot.slane %v1242, 4
        %v1320 = vadd.f32 %v1242, %v1319
        %v1321 = vrot.slane %v1320, 2
        %v1322 = vadd.f32 %v1320, %v1321
        %v1323 = vrot.slane %v1322, 1
        %v1324 = vadd.f32 %v1322, %v1323
        %v1325 = vrot.slane %v1243, 4
        %v1326 = vadd.f32 %v1243, %v1325
        %v1327 = vrot.slane %v1326, 2
        %v1328 = vadd.f32 %v1326, %v1327
        %v1329 = vrot.slane %v1328, 1
        %v1330 = vadd.f32 %v1328, %v1329
        %v1331 = vrot.slane %v1244, 4
        %v1332 = vadd.f32 %v1244, %v1331
        %v1333 = vrot.slane %v1332, 2
        %v1334 = vadd.f32 %v1332, %v1333
        %v1335 = vrot.slane %v1334, 1
        %v1336 = vadd.f32 %v1334, %v1335
        %v1337 = vrot.slane %v1245, 4
        %v1338 = vadd.f32 %v1245, %v1337
        %v1339 = vrot.slane %v1338, 2
        %v1340 = vadd.f32 %v1338, %v1339
        %v1341 = vrot.slane %v1340, 1
        %v1342 = vadd.f32 %v1340, %v1341
        %v1343 = vrot.slane %v1246, 4
        %v1344 = vadd.f32 %v1246, %v1343
        %v1345 = vrot.slane %v1344, 2
        %v1346 = vadd.f32 %v1344, %v1345
        %v1347 = vrot.slane %v1346, 1
        %v1348 = vadd.f32 %v1346, %v1347
        %v1349 = vrot.slane %v1247, 4
        %v1350 = vadd.f32 %v1247, %v1349
        %v1351 = vrot.slane %v1350, 2
        %v1352 = vadd.f32 %v1350, %v1351
        %v1353 = vrot.slane %v1352, 1
        %v1354 = vadd.f32 %v1352, %v1353
        %v1355 = vrot.slane %v1248, 4
        %v1356 = vadd.f32 %v1248, %v1355
        %v1357 = vrot.slane %v1356, 2
        %v1358 = vadd.f32 %v1356, %v1357
        %v1359 = vrot.slane %v1358, 1
        %v1360 = vadd.f32 %v1358, %v1359
        %v1361 = vrot.slane %v1249, 4
        %v1362 = vadd.f32 %v1249, %v1361
        %v1363 = vrot.slane %v1362, 2
        %v1364 = vadd.f32 %v1362, %v1363
        %v1365 = vrot.slane %v1364, 1
        %v1366 = vadd.f32 %v1364, %v1365
        %v1367 = vrot.slane %v1250, 4
        %v1368 = vadd.f32 %v1250, %v1367
        %v1369 = vrot.slane %v1368, 2
        %v1370 = vadd.f32 %v1368, %v1369
        %v1371 = vrot.slane %v1370, 1
        %v1372 = vadd.f32 %v1370, %v1371
        %v1373 = vrot.slane %v1251, 4
        %v1374 = vadd.f32 %v1251, %v1373
        %v1375 = vrot.slane %v1374, 2
        %v1376 = vadd.f32 %v1374, %v1375
        %v1377 = vrot.slane %v1376, 1
        %v1378 = vadd.f32 %v1376, %v1377
        %v1379 = vrot.slane %v1252, 4
        %v1380 = vadd.f32 %v1252, %v1379
        %v1381 = vrot.slane %v1380, 2
        %v1382 = vadd.f32 %v1380, %v1381
        %v1383 = vrot.slane %v1382, 1
        %v1384 = vadd.f32 %v1382, %v1383
        %v1385 = vrot.slane %v1253, 4
        %v1386 = vadd.f32 %v1253, %v1385
        %v1387 = vrot.slane %v1386, 2
        %v1388 = vadd.f32 %v1386, %v1387
        %v1389 = vrot.slane %v1388, 1
        %v1390 = vadd.f32 %v1388, %v1389
        %v1391 = vrot.slane %v1254, 4
        %v1392 = vadd.f32 %v1254, %v1391
        %v1393 = vrot.slane %v1392, 2
        %v1394 = vadd.f32 %v1392, %v1393
        %v1395 = vrot.slane %v1394, 1
        %v1396 = vadd.f32 %v1394, %v1395
        %v1397 = vrot.slane %v1255, 4
        %v1398 = vadd.f32 %v1255, %v1397
        %v1399 = vrot.slane %v1398, 2
        %v1400 = vadd.f32 %v1398, %v1399
        %v1401 = vrot.slane %v1400, 1
        %v1402 = vadd.f32 %v1400, %v1401
        %v1403 = vrot.slane %v1256, 4
        %v1404 = vadd.f32 %v1256, %v1403
        %v1405 = vrot.slane %v1404, 2
        %v1406 = vadd.f32 %v1404, %v1405
        %v1407 = vrot.slane %v1406, 1
        %v1408 = vadd.f32 %v1406, %v1407
        %v1409 = vrot.slane %v1257, 4
        %v1410 = vadd.f32 %v1257, %v1409
        %v1411 = vrot.slane %v1410, 2
        %v1412 = vadd.f32 %v1410, %v1411
        %v1413 = vrot.slane %v1412, 1
        %v1414 = vadd.f32 %v1412, %v1413
        %v1415 = vrot.slane %v1258, 4
        %v1416 = vadd.f32 %v1258, %v1415
        %v1417 = vrot.slane %v1416, 2
        %v1418 = vadd.f32 %v1416, %v1417
        %v1419 = vrot.slane %v1418, 1
        %v1420 = vadd.f32 %v1418, %v1419
        %v1421 = vrot.slane %v1259, 4
        %v1422 = vadd.f32 %v1259, %v1421
        %v1423 = vrot.slane %v1422, 2
        %v1424 = vadd.f32 %v1422, %v1423
        %v1425 = vrot.slane %v1424, 1
        %v1426 = vadd.f32 %v1424, %v1425
        %v1427 = vrot.slane %v1260, 4
        %v1428 = vadd.f32 %v1260, %v1427
        %v1429 = vrot.slane %v1428, 2
        %v1430 = vadd.f32 %v1428, %v1429
        %v1431 = vrot.slane %v1430, 1
        %v1432 = vadd.f32 %v1430, %v1431
        %v1433 = vrot.slane %v1261, 4
        %v1434 = vadd.f32 %v1261, %v1433
        %v1435 = vrot.slane %v1434, 2
        %v1436 = vadd.f32 %v1434, %v1435
        %v1437 = vrot.slane %v1436, 1
        %v1438 = vadd.f32 %v1436, %v1437
        %v1439 = vrot.slane %v1262, 4
        %v1440 = vadd.f32 %v1262, %v1439
        %v1441 = vrot.slane %v1440, 2
        %v1442 = vadd.f32 %v1440, %v1441
        %v1443 = vrot.slane %v1442, 1
        %v1444 = vadd.f32 %v1442, %v1443
        %v1445 = vrot.slane %v1263, 4
        %v1446 = vadd.f32 %v1263, %v1445
        %v1447 = vrot.slane %v1446, 2
        %v1448 = vadd.f32 %v1446, %v1447
        %v1449 = vrot.slane %v1448, 1
        %v1450 = vadd.f32 %v1448, %v1449
        %v1451 = vrot.slane %v1264, 4
        %v1452 = vadd.f32 %v1264, %v1451
        %v1453 = vrot.slane %v1452, 2
        %v1454 = vadd.f32 %v1452, %v1453
        %v1455 = vrot.slane %v1454, 1
        %v1456 = vadd.f32 %v1454, %v1455
        %v1457 = vrcp.pop %v1270
        %v1458 = vmul.f32 %v1233, %v1457
        %v1459 = vrcp.pop %v1276
        %v1460 = vmul.f32 %v1234, %v1459
        %v1461 = vrcp.pop %v1282
        %v1462 = vmul.f32 %v1235, %v1461
        %v1463 = vrcp.pop %v1288
        %v1464 = vmul.f32 %v1236, %v1463
        %v1465 = vrcp.pop %v1294
        %v1466 = vmul.f32 %v1237, %v1465
        %v1467 = vrcp.pop %v1300
        %v1468 = vmul.f32 %v1238, %v1467
        %v1469 = vrcp.pop %v1306
        %v1470 = vmul.f32 %v1239, %v1469
        %v1471 = vrcp.pop %v1312
        %v1472 = vmul.f32 %v1240, %v1471
        %v1473 = vrcp.pop %v1318
        %v1474 = vmul.f32 %v1241, %v1473
        %v1475 = vrcp.pop %v1324
        %v1476 = vmul.f32 %v1242, %v1475
        %v1477 = vrcp.pop %v1330
        %v1478 = vmul.f32 %v1243, %v1477
        %v1479 = vrcp.pop %v1336
        %v1480 = vmul.f32 %v1244, %v1479
        %v1481 = vrcp.pop %v1342
        %v1482 = vmul.f32 %v1245, %v1481
        %v1483 = vrcp.pop %v1348
        %v1484 = vmul.f32 %v1246, %v1483
        %v1485 = vrcp.pop %v1354
        %v1486 = vmul.f32 %v1247, %v1485
        %v1487 = vrcp.pop %v1360
        %v1488 = vmul.f32 %v1248, %v1487
        %v1489 = vrcp.pop %v1366
        %v1490 = vmul.f32 %v1249, %v1489
        %v1491 = vrcp.pop %v1372
        %v1492 = vmul.f32 %v1250, %v1491
        %v1493 = vrcp.pop %v1378
        %v1494 = vmul.f32 %v1251, %v1493
        %v1495 = vrcp.pop %v1384
        %v1496 = vmul.f32 %v1252, %v1495
        %v1497 = vrcp.pop %v1390
        %v1498 = vmul.f32 %v1253, %v1497
        %v1499 = vrcp.pop %v1396
        %v1500 = vmul.f32 %v1254, %v1499
        %v1501 = vrcp.pop %v1402
        %v1502 = vmul.f32 %v1255, %v1501
        %v1503 = vrcp.pop %v1408
        %v1504 = vmul.f32 %v1256, %v1503
        %v1505 = vrcp.pop %v1414
        %v1506 = vmul.f32 %v1257, %v1505
        %v1507 = vrcp.pop %v1420
        %v1508 = vmul.f32 %v1258, %v1507
        %v1509 = vrcp.pop %v1426
        %v1510 = vmul.f32 %v1259, %v1509
        %v1511 = vrcp.pop %v1432
        %v1512 = vmul.f32 %v1260, %v1511
        %v1513 = vrcp.pop %v1438
        %v1514 = vmul.f32 %v1261, %v1513
        %v1515 = vrcp.pop %v1444
        %v1516 = vmul.f32 %v1262, %v1515
        %v1517 = vrcp.pop %v1450
        %v1518 = vmul.f32 %v1263, %v1517
        %v1519 = vrcp.pop %v1456
        %v1520 = vmul.f32 %v1264, %v1519
        %v1521 = vmul.f32 %v1458, %v312
        %v1522 = vmul.f32 %v1460, %v313
        %v1523 = vmul.f32 %v1462, %v314
        %v1524 = vmul.f32 %v1464, %v315
        %v1525 = vmul.f32 %v1466, %v316
        %v1526 = vmul.f32 %v1468, %v317
        %v1527 = vmul.f32 %v1470, %v318
        %v1528 = vmul.f32 %v1472, %v319
        %v1529 = vmul.f32 %v1474, %v320
        %v1530 = vmul.f32 %v1476, %v321
        %v1531 = vmul.f32 %v1478, %v322
        %v1532 = vmul.f32 %v1480, %v323
        %v1533 = vmul.f32 %v1482, %v324
        %v1534 = vmul.f32 %v1484, %v325
        %v1535 = vmul.f32 %v1486, %v326
        %v1536 = vmul.f32 %v1488, %v327
        %v1537 = vmul.f32 %v1490, %v328
        %v1538 = vmul.f32 %v1492, %v329
        %v1539 = vmul.f32 %v1494, %v330
        %v1540 = vmul.f32 %v1496, %v331
        %v1541 = vmul.f32 %v1498, %v332
        %v1542 = vmul.f32 %v1500, %v333
        %v1543 = vmul.f32 %v1502, %v334
        %v1544 = vmul.f32 %v1504, %v335
        %v1545 = vmul.f32 %v1506, %v336
        %v1546 = vmul.f32 %v1508, %v337
        %v1547 = vmul.f32 %v1510, %v338
        %v1548 = vmul.f32 %v1512, %v339
        %v1549 = vmul.f32 %v1514, %v340
        %v1550 = vmul.f32 %v1516, %v341
        %v1551 = vmul.f32 %v1518, %v342
        %v1552 = vmul.f32 %v1520, %v343
        %v1553 = vrot.slane %v1521, 4
        %v1554 = vadd.f32 %v1521, %v1553
        %v1555 = vrot.slane %v1554, 2
        %v1556 = vadd.f32 %v1554, %v1555
        %v1557 = vrot.slane %v1556, 1
        %v1558 = vadd.f32 %v1556, %v1557
        %v1559 = vrot.slane %v1522, 4
        %v1560 = vadd.f32 %v1522, %v1559
        %v1561 = vrot.slane %v1560, 2
        %v1562 = vadd.f32 %v1560, %v1561
        %v1563 = vrot.slane %v1562, 1
        %v1564 = vadd.f32 %v1562, %v1563
        %v1565 = vrot.slane %v1523, 4
        %v1566 = vadd.f32 %v1523, %v1565
        %v1567 = vrot.slane %v1566, 2
        %v1568 = vadd.f32 %v1566, %v1567
        %v1569 = vrot.slane %v1568, 1
        %v1570 = vadd.f32 %v1568, %v1569
        %v1571 = vrot.slane %v1524, 4
        %v1572 = vadd.f32 %v1524, %v1571
        %v1573 = vrot.slane %v1572, 2
        %v1574 = vadd.f32 %v1572, %v1573
        %v1575 = vrot.slane %v1574, 1
        %v1576 = vadd.f32 %v1574, %v1575
        %v1577 = vrot.slane %v1525, 4
        %v1578 = vadd.f32 %v1525, %v1577
        %v1579 = vrot.slane %v1578, 2
        %v1580 = vadd.f32 %v1578, %v1579
        %v1581 = vrot.slane %v1580, 1
        %v1582 = vadd.f32 %v1580, %v1581
        %v1583 = vrot.slane %v1526, 4
        %v1584 = vadd.f32 %v1526, %v1583
        %v1585 = vrot.slane %v1584, 2
        %v1586 = vadd.f32 %v1584, %v1585
        %v1587 = vrot.slane %v1586, 1
        %v1588 = vadd.f32 %v1586, %v1587
        %v1589 = vrot.slane %v1527, 4
        %v1590 = vadd.f32 %v1527, %v1589
        %v1591 = vrot.slane %v1590, 2
        %v1592 = vadd.f32 %v1590, %v1591
        %v1593 = vrot.slane %v1592, 1
        %v1594 = vadd.f32 %v1592, %v1593
        %v1595 = vrot.slane %v1528, 4
        %v1596 = vadd.f32 %v1528, %v1595
        %v1597 = vrot.slane %v1596, 2
        %v1598 = vadd.f32 %v1596, %v1597
        %v1599 = vrot.slane %v1598, 1
        %v1600 = vadd.f32 %v1598, %v1599
        %v1601 = vrot.slane %v1529, 4
        %v1602 = vadd.f32 %v1529, %v1601
        %v1603 = vrot.slane %v1602, 2
        %v1604 = vadd.f32 %v1602, %v1603
        %v1605 = vrot.slane %v1604, 1
        %v1606 = vadd.f32 %v1604, %v1605
        %v1607 = vrot.slane %v1530, 4
        %v1608 = vadd.f32 %v1530, %v1607
        %v1609 = vrot.slane %v1608, 2
        %v1610 = vadd.f32 %v1608, %v1609
        %v1611 = vrot.slane %v1610, 1
        %v1612 = vadd.f32 %v1610, %v1611
        %v1613 = vrot.slane %v1531, 4
        %v1614 = vadd.f32 %v1531, %v1613
        %v1615 = vrot.slane %v1614, 2
        %v1616 = vadd.f32 %v1614, %v1615
        %v1617 = vrot.slane %v1616, 1
        %v1618 = vadd.f32 %v1616, %v1617
        %v1619 = vrot.slane %v1532, 4
        %v1620 = vadd.f32 %v1532, %v1619
        %v1621 = vrot.slane %v1620, 2
        %v1622 = vadd.f32 %v1620, %v1621
        %v1623 = vrot.slane %v1622, 1
        %v1624 = vadd.f32 %v1622, %v1623
        %v1625 = vrot.slane %v1533, 4
        %v1626 = vadd.f32 %v1533, %v1625
        %v1627 = vrot.slane %v1626, 2
        %v1628 = vadd.f32 %v1626, %v1627
        %v1629 = vrot.slane %v1628, 1
        %v1630 = vadd.f32 %v1628, %v1629
        %v1631 = vrot.slane %v1534, 4
        %v1632 = vadd.f32 %v1534, %v1631
        %v1633 = vrot.slane %v1632, 2
        %v1634 = vadd.f32 %v1632, %v1633
        %v1635 = vrot.slane %v1634, 1
        %v1636 = vadd.f32 %v1634, %v1635
        %v1637 = vrot.slane %v1535, 4
        %v1638 = vadd.f32 %v1535, %v1637
        %v1639 = vrot.slane %v1638, 2
        %v1640 = vadd.f32 %v1638, %v1639
        %v1641 = vrot.slane %v1640, 1
        %v1642 = vadd.f32 %v1640, %v1641
        %v1643 = vrot.slane %v1536, 4
        %v1644 = vadd.f32 %v1536, %v1643
        %v1645 = vrot.slane %v1644, 2
        %v1646 = vadd.f32 %v1644, %v1645
        %v1647 = vrot.slane %v1646, 1
        %v1648 = vadd.f32 %v1646, %v1647
        %v1649 = vrot.slane %v1537, 4
        %v1650 = vadd.f32 %v1537, %v1649
        %v1651 = vrot.slane %v1650, 2
        %v1652 = vadd.f32 %v1650, %v1651
        %v1653 = vrot.slane %v1652, 1
        %v1654 = vadd.f32 %v1652, %v1653
        %v1655 = vrot.slane %v1538, 4
        %v1656 = vadd.f32 %v1538, %v1655
        %v1657 = vrot.slane %v1656, 2
        %v1658 = vadd.f32 %v1656, %v1657
        %v1659 = vrot.slane %v1658, 1
        %v1660 = vadd.f32 %v1658, %v1659
        %v1661 = vrot.slane %v1539, 4
        %v1662 = vadd.f32 %v1539, %v1661
        %v1663 = vrot.slane %v1662, 2
        %v1664 = vadd.f32 %v1662, %v1663
        %v1665 = vrot.slane %v1664, 1
        %v1666 = vadd.f32 %v1664, %v1665
        %v1667 = vrot.slane %v1540, 4
        %v1668 = vadd.f32 %v1540, %v1667
        %v1669 = vrot.slane %v1668, 2
        %v1670 = vadd.f32 %v1668, %v1669
        %v1671 = vrot.slane %v1670, 1
        %v1672 = vadd.f32 %v1670, %v1671
        %v1673 = vrot.slane %v1541, 4
        %v1674 = vadd.f32 %v1541, %v1673
        %v1675 = vrot.slane %v1674, 2
        %v1676 = vadd.f32 %v1674, %v1675
        %v1677 = vrot.slane %v1676, 1
        %v1678 = vadd.f32 %v1676, %v1677
        %v1679 = vrot.slane %v1542, 4
        %v1680 = vadd.f32 %v1542, %v1679
        %v1681 = vrot.slane %v1680, 2
        %v1682 = vadd.f32 %v1680, %v1681
        %v1683 = vrot.slane %v1682, 1
        %v1684 = vadd.f32 %v1682, %v1683
        %v1685 = vrot.slane %v1543, 4
        %v1686 = vadd.f32 %v1543, %v1685
        %v1687 = vrot.slane %v1686, 2
        %v1688 = vadd.f32 %v1686, %v1687
        %v1689 = vrot.slane %v1688, 1
        %v1690 = vadd.f32 %v1688, %v1689
        %v1691 = vrot.slane %v1544, 4
        %v1692 = vadd.f32 %v1544, %v1691
        %v1693 = vrot.slane %v1692, 2
        %v1694 = vadd.f32 %v1692, %v1693
        %v1695 = vrot.slane %v1694, 1
        %v1696 = vadd.f32 %v1694, %v1695
        %v1697 = vrot.slane %v1545, 4
        %v1698 = vadd.f32 %v1545, %v1697
        %v1699 = vrot.slane %v1698, 2
        %v1700 = vadd.f32 %v1698, %v1699
        %v1701 = vrot.slane %v1700, 1
        %v1702 = vadd.f32 %v1700, %v1701
        %v1703 = vrot.slane %v1546, 4
        %v1704 = vadd.f32 %v1546, %v1703
        %v1705 = vrot.slane %v1704, 2
        %v1706 = vadd.f32 %v1704, %v1705
        %v1707 = vrot.slane %v1706, 1
        %v1708 = vadd.f32 %v1706, %v1707
        %v1709 = vrot.slane %v1547, 4
        %v1710 = vadd.f32 %v1547, %v1709
        %v1711 = vrot.slane %v1710, 2
        %v1712 = vadd.f32 %v1710, %v1711
        %v1713 = vrot.slane %v1712, 1
        %v1714 = vadd.f32 %v1712, %v1713
        %v1715 = vrot.slane %v1548, 4
        %v1716 = vadd.f32 %v1548, %v1715
        %v1717 = vrot.slane %v1716, 2
        %v1718 = vadd.f32 %v1716, %v1717
        %v1719 = vrot.slane %v1718, 1
        %v1720 = vadd.f32 %v1718, %v1719
        %v1721 = vrot.slane %v1549, 4
        %v1722 = vadd.f32 %v1549, %v1721
        %v1723 = vrot.slane %v1722, 2
        %v1724 = vadd.f32 %v1722, %v1723
        %v1725 = vrot.slane %v1724, 1
        %v1726 = vadd.f32 %v1724, %v1725
        %v1727 = vrot.slane %v1550, 4
        %v1728 = vadd.f32 %v1550, %v1727
        %v1729 = vrot.slane %v1728, 2
        %v1730 = vadd.f32 %v1728, %v1729
        %v1731 = vrot.slane %v1730, 1
        %v1732 = vadd.f32 %v1730, %v1731
        %v1733 = vrot.slane %v1551, 4
        %v1734 = vadd.f32 %v1551, %v1733
        %v1735 = vrot.slane %v1734, 2
        %v1736 = vadd.f32 %v1734, %v1735
        %v1737 = vrot.slane %v1736, 1
        %v1738 = vadd.f32 %v1736, %v1737
        %v1739 = vrot.slane %v1552, 4
        %v1740 = vadd.f32 %v1552, %v1739
        %v1741 = vrot.slane %v1740, 2
        %v1742 = vadd.f32 %v1740, %v1741
        %v1743 = vrot.slane %v1742, 1
        %v1744 = vadd.f32 %v1742, %v1743
        %vm1777 = vcmask 1041409
        %v1778 = vsel %vm1777, %v1564, %v1558
        %vm1779 = vcmask 1042434
        %v1780 = vsel %vm1779, %v1570, %v1778
        %vm1781 = vcmask 1043459
        %v1782 = vsel %vm1781, %v1576, %v1780
        %vm1783 = vcmask 1044484
        %v1784 = vsel %vm1783, %v1582, %v1782
        %vm1785 = vcmask 1045509
        %v1786 = vsel %vm1785, %v1588, %v1784
        %vm1787 = vcmask 1046534
        %v1788 = vsel %vm1787, %v1594, %v1786
        %vm1789 = vcmask 1047559
        %v1790 = vsel %vm1789, %v1600, %v1788
        %v1791 = vsel %vm1777, %v1612, %v1606
        %v1792 = vsel %vm1779, %v1618, %v1791
        %v1793 = vsel %vm1781, %v1624, %v1792
        %v1794 = vsel %vm1783, %v1630, %v1793
        %v1795 = vsel %vm1785, %v1636, %v1794
        %v1796 = vsel %vm1787, %v1642, %v1795
        %v1797 = vsel %vm1789, %v1648, %v1796
        %v1798 = vsel %vm1777, %v1660, %v1654
        %v1799 = vsel %vm1779, %v1666, %v1798
        %v1800 = vsel %vm1781, %v1672, %v1799
        %v1801 = vsel %vm1783, %v1678, %v1800
        %v1802 = vsel %vm1785, %v1684, %v1801
        %v1803 = vsel %vm1787, %v1690, %v1802
        %v1804 = vsel %vm1789, %v1696, %v1803
        %v1805 = vsel %vm1777, %v1708, %v1702
        %v1806 = vsel %vm1779, %v1714, %v1805
        %v1807 = vsel %vm1781, %v1720, %v1806
        %v1808 = vsel %vm1783, %v1726, %v1807
        %v1809 = vsel %vm1785, %v1732, %v1808
        %v1810 = vsel %vm1787, %v1738, %v1809
        %v1811 = vsel %vm1789, %v1744, %v1810
        %1816 = vmatprep.subr.mxu0 0.0
        %1817 = vmatpush1.msra.mxu0 %v344
        %1818 = vmatprep.subr.mxu0 0.0
        %1819 = vmatpush1.msra.mxu0 %v345
        %1820 = vmatprep.subr.mxu0 0.0
        %1821 = vmatpush1.msra.mxu0 %v346
        %1822 = vmatprep.subr.mxu0 0.0
        %1823 = vmatpush1.msra.mxu0 %v347
        %1824 = vmatprep.subr.mxu0 0.0
        %1825 = vmatpush1.msra.mxu0 %v348
        %1826 = vmatprep.subr.mxu0 0.0
        %1827 = vmatpush1.msra.mxu0 %v349
        %1828 = vmatprep.subr.mxu0 0.0
        %1829 = vmatpush1.msra.mxu0 %v350
        %1830 = vmatprep.subr.mxu0 0.0
        %1831 = vmatpush1.msra.mxu0 %v351
        %1832 = vmatprep.subr.mxu0 0.0
        %1833 = vmatpush1.msra.mxu0 %v352
        %1834 = vmatprep.subr.mxu0 0.0
        %1835 = vmatpush1.msra.mxu0 %v353
        %1836 = vmatprep.subr.mxu0 0.0
        %1837 = vmatpush1.msra.mxu0 %v354
        %1838 = vmatprep.subr.mxu0 0.0
        %1839 = vmatpush1.msra.mxu0 %v355
        %1840 = vmatprep.subr.mxu0 0.0
        %1841 = vmatpush1.msra.mxu0 %v356
        %1842 = vmatprep.subr.mxu0 0.0
        %1843 = vmatpush1.msra.mxu0 %v357
        %1844 = vmatprep.subr.mxu0 0.0
        %1845 = vmatpush1.msra.mxu0 %v358
        %1846 = vmatprep.subr.mxu0 0.0
        %1847 = vmatpush1.msra.mxu0 %v359
        %1848 = vmatprep.subr.mxu0 0.0
        %1849 = vmatpush1.msra.mxu0 0.0
        %1850 = vmatprep.subr.mxu0 0.0
        %1851 = vmatpush1.msra.mxu0 0.0
        %1852 = vmatprep.subr.mxu0 0.0
        %1853 = vmatpush1.msra.mxu0 0.0
        %1854 = vmatprep.subr.mxu0 0.0
        %1855 = vmatpush1.msra.mxu0 0.0
        %1856 = vmatprep.subr.mxu0 0.0
        %1857 = vmatpush1.msra.mxu0 0.0
        %1858 = vmatprep.subr.mxu0 0.0
        %1859 = vmatpush1.msra.mxu0 0.0
        %1860 = vmatprep.subr.mxu0 0.0
        %1861 = vmatpush1.msra.mxu0 0.0
        %1862 = vmatprep.subr.mxu0 0.0
        %1863 = vmatpush1.msra.mxu0 0.0
        %1864 = vmatprep.subr.mxu0 0.0
        %1865 = vmatpush1.msra.mxu0 0.0
        %1866 = vmatprep.subr.mxu0 0.0
        %1867 = vmatpush1.msra.mxu0 0.0
        %1868 = vmatprep.subr.mxu0 0.0
        %1869 = vmatpush1.msra.mxu0 0.0
        %1870 = vmatprep.subr.mxu0 0.0
        %1871 = vmatpush1.msra.mxu0 0.0
        %1872 = vmatprep.subr.mxu0 0.0
        %1873 = vmatpush1.msra.mxu0 0.0
        %1874 = vmatprep.subr.mxu0 0.0
        %1875 = vmatpush1.msra.mxu0 0.0
        %1876 = vmatprep.subr.mxu0 0.0
        %1877 = vmatpush1.msra.mxu0 0.0
        %1878 = vmatprep.subr.mxu0 0.0
        %1879 = vmatpush1.msra.mxu0 0.0
        %1880 = vmatprep.mubr.f32.mxu0 0.0
        %1881 = vmatmul.mubr.f32.gmra.mrb[0].mxu0 %v1790
        %v1882 = vpop.f32.mrb[0].mxu0
        %v1883 = vadd.f32 %v365, %v1882
        %v1884 = vpop.f32.mrb[0].mxu0
        %1885 = vmatprep.mubr.f32.mxu0 0.0
        %1886 = vmatmul.mubr.f32.gmra.mrb[0].mxu0 %v1797
        %v1887 = vpop.f32.mrb[0].mxu0
        %v1888 = vadd.f32 %v365, %v1887
        %v1889 = vpop.f32.mrb[0].mxu0
        %1890 = vmatprep.mubr.f32.mxu0 0.0
        %1891 = vmatmul.mubr.f32.gmra.mrb[0].mxu0 %v1804
        %v1892 = vpop.f32.mrb[0].mxu0
        %v1893 = vadd.f32 %v365, %v1892
        %v1894 = vpop.f32.mrb[0].mxu0
        %1895 = vmatprep.mubr.f32.mxu0 0.0
        %1896 = vmatmul.mubr.f32.gmra.mrb[0].mxu0 %v1811
        %v1897 = vpop.f32.mrb[0].mxu0
        %v1898 = vadd.f32 %v365, %v1897
        %v1899 = vpop.f32.mrb[0].mxu0
        %1900 = vdwg.mxu0
        %1901 = vst.msk [vmem:[%s297] sm:$0xff] %vm624, %v1883
        %1902 = vst.msk [vmem:[%s297 + $0x8] sm:$0xff] %vm624, %v1888
        %1903 = vst.msk [vmem:[%s297 + $0x10] sm:$0xff] %vm624, %v1893
        %1904 = vst.msk [vmem:[%s297 + $0x18] sm:$0xff] %vm624, %v1898
        %1905 = vst [vmem:[%s277] sm:$0xff] %v1790
        %1906 = vst [vmem:[%s277 + $0x8] sm:$0xff] %v1797
        %1907 = vst [vmem:[%s277 + $0x10] sm:$0xff] %v1804
        %1908 = vst [vmem:[%s277 + $0x18] sm:$0xff] %v1811
        %vm1909 = vcmask 7168
        %1910 = vst.msk [vmem:[%s304] sm:$0xff] %vm1909, %v1458
        %1911 = vst.msk [vmem:[%s304 + $0x8] sm:$0xff] %vm1909, %v1460
        %1912 = vst.msk [vmem:[%s304 + $0x10] sm:$0xff] %vm1909, %v1462
        %1913 = vst.msk [vmem:[%s304 + $0x18] sm:$0xff] %vm1909, %v1464
        %1914 = vst.msk [vmem:[%s304 + $0x20] sm:$0xff] %vm1909, %v1466
        %1915 = vst.msk [vmem:[%s304 + $0x28] sm:$0xff] %vm1909, %v1468
        %1916 = vst.msk [vmem:[%s304 + $0x30] sm:$0xff] %vm1909, %v1470
        %1917 = vst.msk [vmem:[%s304 + $0x38] sm:$0xff] %vm1909, %v1472
        %1918 = vst.msk [vmem:[%s304 + $0x40] sm:$0xff] %vm1909, %v1474
        %1919 = vst.msk [vmem:[%s304 + $0x48] sm:$0xff] %vm1909, %v1476
        %1920 = vst.msk [vmem:[%s304 + $0x50] sm:$0xff] %vm1909, %v1478
        %1921 = vst.msk [vmem:[%s304 + $0x58] sm:$0xff] %vm1909, %v1480
        %1922 = vst.msk [vmem:[%s304 + $0x60] sm:$0xff] %vm1909, %v1482
        %1923 = vst.msk [vmem:[%s304 + $0x68] sm:$0xff] %vm1909, %v1484
        %1924 = vst.msk [vmem:[%s304 + $0x70] sm:$0xff] %vm1909, %v1486
        %1925 = vst.msk [vmem:[%s304 + $0x78] sm:$0xff] %vm1909, %v1488
        %1926 = vst.msk [vmem:[%s304 + $0x80] sm:$0xff] %vm1909, %v1490
        %1927 = vst.msk [vmem:[%s304 + $0x88] sm:$0xff] %vm1909, %v1492
        %1928 = vst.msk [vmem:[%s304 + $0x90] sm:$0xff] %vm1909, %v1494
        %1929 = vst.msk [vmem:[%s304 + $0x98] sm:$0xff] %vm1909, %v1496
        %1930 = vst.msk [vmem:[%s304 + $0xa0] sm:$0xff] %vm1909, %v1498
        %1931 = vst.msk [vmem:[%s304 + $0xa8] sm:$0xff] %vm1909, %v1500
        %1932 = vst.msk [vmem:[%s304 + $0xb0] sm:$0xff] %vm1909, %v1502
        %1933 = vst.msk [vmem:[%s304 + $0xb8] sm:$0xff] %vm1909, %v1504
        %1934 = vst.msk [vmem:[%s304 + $0xc0] sm:$0xff] %vm1909, %v1506
        %1935 = vst.msk [vmem:[%s304 + $0xc8] sm:$0xff] %vm1909, %v1508
        %1936 = vst.msk [vmem:[%s304 + $0xd0] sm:$0xff] %vm1909, %v1510
        %1937 = vst.msk [vmem:[%s304 + $0xd8] sm:$0xff] %vm1909, %v1512
        %1938 = vst.msk [vmem:[%s304 + $0xe0] sm:$0xff] %vm1909, %v1514
        %1939 = vst.msk [vmem:[%s304 + $0xe8] sm:$0xff] %vm1909, %v1516
        %1940 = vst.msk [vmem:[%s304 + $0xf0] sm:$0xff] %vm1909, %v1518
        %1941 = vst.msk [vmem:[%s304 + $0xf8] sm:$0xff] %vm1909, %v1520
        %1942 = vst.msk [vmem:[%s310] sm:$0xff] %vm624, %v434
        %1943 = vst.msk [vmem:[%s310 + $0x8] sm:$0xff] %vm624, %v439
        %1944 = vst.msk [vmem:[%s310 + $0x10] sm:$0xff] %vm624, %v444
        %1945 = vst.msk [vmem:[%s310 + $0x18] sm:$0xff] %vm624, %v449
        %1946 = vst.msk [vmem:[%s310 + $0x20] sm:$0xff] %vm624, %v454
        %1947 = vst.msk [vmem:[%s310 + $0x28] sm:$0xff] %vm624, %v459
        %1948 = vst.msk [vmem:[%s310 + $0x30] sm:$0xff] %vm624, %v464
        %1949 = vst.msk [vmem:[%s310 + $0x38] sm:$0xff] %vm624, %v469
        %1950 = vst.msk [vmem:[%s310 + $0x40] sm:$0xff] %vm624, %v474
        %1951 = vst.msk [vmem:[%s310 + $0x48] sm:$0xff] %vm624, %v479
        %1952 = vst.msk [vmem:[%s310 + $0x50] sm:$0xff] %vm624, %v484
        %1953 = vst.msk [vmem:[%s310 + $0x58] sm:$0xff] %vm624, %v489
        %1954 = vst.msk [vmem:[%s310 + $0x60] sm:$0xff] %vm624, %v494
        %1955 = vst.msk [vmem:[%s310 + $0x68] sm:$0xff] %vm624, %v499
        %1956 = vst.msk [vmem:[%s310 + $0x70] sm:$0xff] %vm624, %v504
        %1957 = vst.msk [vmem:[%s310 + $0x78] sm:$0xff] %vm624, %v509
        %1958 = vst.msk [vmem:[%s310 + $0x80] sm:$0xff] %vm624, %v514
        %1959 = vst.msk [vmem:[%s310 + $0x88] sm:$0xff] %vm624, %v519
        %1960 = vst.msk [vmem:[%s310 + $0x90] sm:$0xff] %vm624, %v524
        %1961 = vst.msk [vmem:[%s310 + $0x98] sm:$0xff] %vm624, %v529
        %1962 = vst.msk [vmem:[%s310 + $0xa0] sm:$0xff] %vm624, %v534
        %1963 = vst.msk [vmem:[%s310 + $0xa8] sm:$0xff] %vm624, %v539
        %1964 = vst.msk [vmem:[%s310 + $0xb0] sm:$0xff] %vm624, %v544
        %1965 = vst.msk [vmem:[%s310 + $0xb8] sm:$0xff] %vm624, %v549
        %1966 = vst.msk [vmem:[%s310 + $0xc0] sm:$0xff] %vm624, %v554
        %1967 = vst.msk [vmem:[%s310 + $0xc8] sm:$0xff] %vm624, %v559
        %1968 = vst.msk [vmem:[%s310 + $0xd0] sm:$0xff] %vm624, %v564
        %1969 = vst.msk [vmem:[%s310 + $0xd8] sm:$0xff] %vm624, %v569
        %1970 = vst.msk [vmem:[%s310 + $0xe0] sm:$0xff] %vm624, %v574
        %1971 = vst.msk [vmem:[%s310 + $0xe8] sm:$0xff] %vm624, %v579
        %1972 = vst.msk [vmem:[%s310 + $0xf0] sm:$0xff] %vm624, %v584
        %1973 = vst.msk [vmem:[%s310 + $0xf8] sm:$0xff] %vm624, %v589
        %s1974 = smul.u32 4, %s24
        %p1975 = scmp.lt.s32.totalorder %s1974, 7
        %s1976 = scalar_select %p1975, %s1974, 7
        %s1977 = smul.addr %s1976, 8
        %s1978 = scalar_lea.vmem %s3, %s1977
        %s1979 = sand.u32 %s126, 1
        %s1980 = scalar_lea.sflag [#allocation4], %s1979
        %s1981 = sand.u32 %s126, 1
        %s1982 = smul.addr %s1981, 32
        %s1983 = scalar_lea.vmem [#allocation5], %s1982
        %s1984 = smul.u32 32, %s24
        %p1985 = scmp.lt.s32.totalorder %s1984, 63
        %s1986 = scalar_select %p1985, %s1984, 63
        %s1987 = smul.addr %s1986, 8
        %s1988 = scalar_lea.vmem %s5, %s1987
        %s1989 = smul.u32 32, %s24
        %p1990 = scmp.lt.s32.totalorder %s1989, 63
        %s1991 = scalar_select %p1990, %s1989, 63
        %s1992 = smul.addr %s1991, 8
        %s1993 = scalar_lea.vmem %s6, %s1992
        // Predicated region
        $region37: #{tpu_custom_call.1} parent=31 // pred_check
          %p1994 = pneg %p110
        $region38: #{tpu_custom_call.1} parent=31 // pred_check_branch
          %1996 = sbr.rel (%p1994) target = $region40
        $region39: #{tpu_custom_call.1} parent=31 // pred_region
          %s1997 = smul.u32 4, %s24
        $region40: #{tpu_custom_call.1} parent=31 // pred_fallthru
          _
        // Predicated region
        $region41: #{tpu_custom_call.1} parent=31 // pred_check
          %p1998 = pneg %p136
        $region42: #{tpu_custom_call.1} parent=31 // pred_check_branch
          %2000 = sbr.rel (%p1998) target = $region44
        $region43: #{tpu_custom_call.1} parent=31 // pred_region
          %s2001 = smul.u32 4, %s24
          %s2003 = ssub.s32 512, 512
          %2004 = vsyncadd %s1980, %s2003
          %s2005 = smul.addr %s2001, 128
          %s2006 = scalar_lea.hbm %s4, %s2005
          %s2007 = sshll.u32 %s1983, 4
          %s2008 = int_to_ptr.vmem [resolvable:$true] %s2007
          %2013 = dma.vmem_to_hbm [thread:$0]  %s2008, 512, %s2006, %s1980, 128, 128, 8
        $region44: #{tpu_custom_call.1} parent=31 // pred_fallthru
          _
        // Predicated region
        $region45: #{tpu_custom_call.1} parent=31 // pred_check
          %p2014 = pneg %p162
        $region46: #{tpu_custom_call.1} parent=31 // pred_check_branch
          %2016 = sbr.rel (%p2014) target = $region48
        $region47: #{tpu_custom_call.1} parent=31 // pred_region
          %s2017 = smul.u32 32, %s24
        $region48: #{tpu_custom_call.1} parent=31 // pred_fallthru
          _
        // Predicated region
        $region49: #{tpu_custom_call.1} parent=31 // pred_check
          %p2018 = pneg %p188
        $region50: #{tpu_custom_call.1} parent=31 // pred_check_branch
          %2020 = sbr.rel (%p2018) target = $region52
        $region51: #{tpu_custom_call.1} parent=31 // pred_region
          %s2021 = smul.u32 32, %s24
        $region52: #{tpu_custom_call.1} parent=31 // pred_fallthru
          _
      $region32: #{tpu_custom_call.1} parent=5 // pred_fallthru
        _
      %p2022 = scmp.le.s32.totalorder 2, %s19
      // Predicated region
      $region53: #{tpu_custom_call.1} parent=5 // pred_check
        %p2023 = pneg %p2022
      $region54: #{tpu_custom_call.1} parent=5 // pred_check_branch
        %2025 = sbr.rel (%p2023) target = $region56
      $region55: #{tpu_custom_call.1} parent=5 // pred_region
        %s2026 = ssub.s32 %s19, 2
        // Predicated region
        $region57: #{tpu_custom_call.1} parent=55 // pred_check
          %p2027 = pneg %p116
        $region58: #{tpu_custom_call.1} parent=55 // pred_check_branch
          %2029 = sbr.rel (%p2027) target = $region60
        $region59: #{tpu_custom_call.1} parent=55 // pred_region
          %s2030 = smul.u32 4, %s25
          %p2031 = scmp.lt.s32.totalorder %s2030, 7
          %s2032 = scalar_select %p2031, %s2030, 7
          %s2033 = smul.addr %s2032, 8
          %s2034 = scalar_lea.vmem %s3, %s2033
        $region60: #{tpu_custom_call.1} parent=55 // pred_fallthru
          _
        // Predicated region
        $region61: #{tpu_custom_call.1} parent=55 // pred_check
          %p2035 = pneg %p142
        $region62: #{tpu_custom_call.1} parent=55 // pred_check_branch
          %2037 = sbr.rel (%p2035) target = $region64
        $region63: #{tpu_custom_call.1} parent=55 // pred_region
          %s2038 = sand.u32 %s127, 1
          %s2039 = scalar_lea.sflag [#allocation4], %s2038
          %s2040 = sand.u32 %s127, 1
          %s2041 = smul.addr %s2040, 32
          %s2042 = scalar_lea.vmem [#allocation5], %s2041
          %2043 = dma.done %s2039, 512
        $region64: #{tpu_custom_call.1} parent=55 // pred_fallthru
          _
        // Predicated region
        $region65: #{tpu_custom_call.1} parent=55 // pred_check
          %p2044 = pneg %p168
        $region66: #{tpu_custom_call.1} parent=55 // pred_check_branch
          %2046 = sbr.rel (%p2044) target = $region68
        $region67: #{tpu_custom_call.1} parent=55 // pred_region
          %s2047 = smul.u32 32, %s25
          %p2048 = scmp.lt.s32.totalorder %s2047, 63
          %s2049 = scalar_select %p2048, %s2047, 63
          %s2050 = smul.addr %s2049, 8
          %s2051 = scalar_lea.vmem %s5, %s2050
        $region68: #{tpu_custom_call.1} parent=55 // pred_fallthru
          _
        // Predicated region
        $region69: #{tpu_custom_call.1} parent=55 // pred_check
          %p2052 = pneg %p194
        $region70: #{tpu_custom_call.1} parent=55 // pred_check_branch
          %2054 = sbr.rel (%p2052) target = $region72
        $region71: #{tpu_custom_call.1} parent=55 // pred_region
          %s2055 = smul.u32 32, %s25
          %p2056 = scmp.lt.s32.totalorder %s2055, 63
          %s2057 = scalar_select %p2056, %s2055, 63
          %s2058 = smul.addr %s2057, 8
          %s2059 = scalar_lea.vmem %s6, %s2058
        $region72: #{tpu_custom_call.1} parent=55 // pred_fallthru
          _
      $region56: #{tpu_custom_call.1} parent=5 // pred_fallthru
        _
    $region6: #{tpu_custom_call.1} parent=1 // loop_footer
      %s23 = sadd.s32 1, %s19
    $region7: #{tpu_custom_call.1} parent=1 // loop_footer_branch
      %18 = sbr.rel target = $region3
    $region8: #{tpu_custom_call.1} parent=1 // loop_exit
      _
    %2060 = vsyncpa [#allocation3], 1
    %s2061 = scalar_lea.sflag [#allocation3], 1
    %2062 = vsyncpa %s2061, 1
    %2063 = vsyncpa [#allocation4], 1
    %s2064 = scalar_lea.sflag [#allocation4], 1
    %2065 = vsyncpa %s2064, 1

</llo_original>
